<compile_context>
chip_gen: v7x
topology: tpu7x:2x2x1
jax: 0.10.0
libtpu: 0.0.40
codegen_flags: <defaults>
</compile_context>

<pallas_src>
import functools
import math

import jax
import jax.numpy as jnp
from jax import lax
from jax.experimental import pallas as pl
from jax.experimental.pallas import tpu as pltpu


_MASK_NEG = -1e30  # finite sentinel keeps softmax on the fast VPU/EUP path


def _mhsa_kernel(*refs, heads, head_dim, mode):
    """mode in {"fused", "separate", "preprojected"}."""
    embed = heads * head_dim

    if mode == "fused":
        # self-attention: one x input, one (E, 3E) fused projection weight
        bias_ref, x_ref, wqkv_ref, wfc_ref, bfc_ref, o_ref, acc_ref = refs
        cdt = x_ref.dtype
        xp = jnp.dot(x_ref[0], wqkv_ref[...],
                     preferred_element_type=jnp.float32).astype(cdt)
        qp = xp[:, :embed]
        kp = xp[:, embed:2 * embed]
        vp = xp[:, 2 * embed:]
    elif mode == "separate":
        (bias_ref, q_ref, k_ref, v_ref, wq_ref, wk_ref, wv_ref,
         wfc_ref, bfc_ref, o_ref, acc_ref) = refs
        cdt = q_ref.dtype
        # whole-tensor casts, hoisted out of the head loop
        qp = jnp.dot(q_ref[0], wq_ref[...],
                     preferred_element_type=jnp.float32).astype(cdt)
        kp = jnp.dot(k_ref[0], wk_ref[...],
                     preferred_element_type=jnp.float32).astype(cdt)
        vp = jnp.dot(v_ref[0], wv_ref[...],
                     preferred_element_type=jnp.float32).astype(cdt)
    else:  # "preprojected": K/V already projected once in the wrapper (n_q > 1)
        (bias_ref, q_ref, kp_ref, vp_ref, wq_ref,
         wfc_ref, bfc_ref, o_ref, acc_ref) = refs
        cdt = q_ref.dtype
        qp = jnp.dot(q_ref[0], wq_ref[...],
                     preferred_element_type=jnp.float32).astype(cdt)
        kp = kp_ref[0]
        vp = vp_ref[0]

    bias = bias_ref[0]  # (1 | bq, lk) f32 additive mask; broadcasts in the add

    # TODO(synk): for very large `heads` a lax.fori_loop(unroll=True) with
    # pl.ds(h*head_dim, head_dim) would bound live ranges, but dynamic
    # lane-dim slicing of in-register values is a lowering risk; heads<=16
    # static unroll is fine.
    for h in range(heads):
        lo, hi = h * head_dim, (h + 1) * head_dim
        qh = qp[:, lo:hi]                       # (bq, D) bf16
        kh = kp[:, lo:hi]                       # (lk, D) bf16
        vh = vp[:, lo:hi]                       # (lk, D) bf16

        # energy[q, k] = <q_h[q], k_h[k]>  (softmax scale folded into Wq;
        # contraction over last axes -> no in-kernel transpose)
        energy = lax.dot_general(qh, kh, (((1,), (1,)), ((), ())),
                                 preferred_element_type=jnp.float32)  # (bq, lk)
        logits = energy + bias
        m = jnp.max(logits, axis=-1, keepdims=True)
        p = jnp.exp(logits - m)
        denom = jnp.sum(p, axis=-1, keepdims=True)

        # Un-normalized P @ V (f32 acc), then normalize the small (bq, D)
        # context instead of the (bq, lk) probabilities.
        ctx = jnp.dot(p.astype(cdt), vh, preferred_element_type=jnp.float32)
        ctx = (ctx * pl.reciprocal(denom, approx=False)).astype(cdt)

        # fc_out fused into the head loop: accumulate into the E-wide slab.
        chunk = jnp.dot(ctx, wfc_ref[lo:hi, :],
                        preferred_element_type=jnp.float32)           # (bq, E)
        if h == 0:
            acc_ref[...] = chunk
        else:
            acc_ref[...] += chunk

    o_ref[0] = (acc_ref[...] + bfc_ref[...]).astype(o_ref.dtype)


def _vmem_and_tile_budget():
    """Generation-aware VMEM limit and max query tile."""
    cap = 64 << 20
    try:
        info = pltpu.get_tpu_info()
        cap = int(getattr(info, "vmem_capacity_bytes", cap) or cap)
    except Exception:
        pass
    if cap >= (100 << 20):          # v5e / v6e: 128 MiB physical VMEM
        return 64 << 20, 1024
    return 32 << 20, 256            # v7x: 64 MiB per TensorCore


def multi_head_self_attention(values, keys, queries, mask, params, *,
                              embed_size, heads, block_q=None,
                              compute_dtype=jnp.bfloat16,
                              out_dtype=jnp.float32):
    """values/keys/queries: (N, L, E) f32; mask broadcastable to (N, H, Lq, Lk)."""
    head_dim = embed_size // heads
    assert head_dim * heads == embed_size
    N, q_len, _ = queries.shape
    k_len = keys.shape[1]
    assert values.shape[1] == k_len, "value_len must equal key_len"
    wv, wk, wq, wfc, bfc = params
    scale = 1.0 / math.sqrt(float(embed_size))

    is_self = (queries is keys) and (keys is values)

    # ---- compact additive mask bias (N, 1|Lq, Lk), never broadcast over heads
    if mask is None:
        bias = jnp.zeros((N, 1, k_len), jnp.float32)
    else:
        m = jnp.asarray(mask)
        m = m.reshape((1,) * (4 - m.ndim) + m.shape)      # right-aligned dims
        # TODO(synk): per-head masks (m.shape[1] > 1) would need an
        # (N, H, Lq, Lk) bias; BERT/AdaGrow masks are head-invariant.
        assert m.shape[1] == 1, "per-head masks not supported"
        lq_m = q_len if m.shape[2] != 1 else 1
        m2 = jnp.broadcast_to(m[:, 0], (N, lq_m, k_len))
        bias = jnp.where(m2 == 0, _MASK_NEG, 0.0).astype(jnp.float32)
    lq_m = bias.shape[1]

    # ---- block-diagonal, pre-transposed weights; softmax scale folded into Wq
    eye = jnp.eye(heads, dtype=jnp.float32)
    wq_blk = (jnp.kron(eye, wq.T) * scale).astype(compute_dtype)
    wk_blk = jnp.kron(eye, wk.T).astype(compute_dtype)
    wv_blk = jnp.kron(eye, wv.T).astype(compute_dtype)
    # TODO(synk): on v5e (128x128 MXU, 197 TF/s) benchmark the shared-weight
    # reshape(L*H, D) @ (D, D) form against this H-times-FLOPs kron form.
    wfc_t = wfc.T.astype(compute_dtype)
    bfc2 = bfc.reshape(1, embed_size).astype(jnp.float32)

    # ---- generation-aware tiling + graceful padding of odd q_len ----------
    vmem_limit, max_block_q = _vmem_and_tile_budget()
    if block_q is None:
        block_q = q_len if q_len <= max_block_q else max_block_q
    assert block_q >= q_len or block_q % 8 == 0, \
        "block_q must cover q_len or be a multiple of 8"

    q_pad = (-q_len) % block_q
    padded_q = q_len + q_pad
    n_q = padded_q // block_q

    queries_p = queries if q_pad == 0 else jnp.pad(queries, ((0, 0), (0, q_pad), (0, 0)))
    bias_p = bias
    if q_pad and lq_m != 1:
        bias_p = jnp.pad(bias, ((0, 0), (0, q_pad), (0, 0)))

    if lq_m == 1:
        bias_spec = pl.BlockSpec((1, 1, k_len), lambda n, qi: (n, 0, 0))
    else:
        bias_spec = pl.BlockSpec((1, block_q, k_len), lambda n, qi: (n, qi, 0))
    q_spec = pl.BlockSpec((1, block_q, embed_size), lambda n, qi: (n, qi, 0))
    kv_spec = pl.BlockSpec((1, k_len, embed_size), lambda n, qi: (n, 0, 0))
    w_spec = lambda r, c: pl.BlockSpec((r, c), lambda n, qi: (0, 0))
    # TODO(synk): pipeline_mode=pl.Buffered(1) on the weight specs would save
    # one VMEM copy of each (they are only fetched once); left off pending
    # API stability of pipeline_mode on this jax version.

    q_in = queries_p.astype(compute_dtype)   # bf16 MXU operands -> half input DMA

    if n_q == 1 and is_self:
        mode = "fused"
        w_qkv = jnp.concatenate([wq_blk, wk_blk, wv_blk], axis=1)   # (E, 3E)
        inputs = (bias_p, q_in, w_qkv, wfc_t, bfc2)
        in_specs = [bias_spec, q_spec,
                    w_spec(embed_size, 3 * embed_size),
                    w_spec(embed_size, embed_size),
                    w_spec(1, embed_size)]
    elif n_q == 1:
        mode = "separate"
        k_in = keys.astype(compute_dtype)
        v_in = values.astype(compute_dtype)
        inputs = (bias_p, q_in, k_in, v_in, wq_blk, wk_blk, wv_blk, wfc_t, bfc2)
        in_specs = [bias_spec, q_spec, kv_spec, kv_spec,
                    w_spec(embed_size, embed_size),
                    w_spec(embed_size, embed_size),
                    w_spec(embed_size, embed_size),
                    w_spec(embed_size, embed_size),
                    w_spec(1, embed_size)]
    else:
        mode = "preprojected"
        # Project K/V ONCE here (bf16 MXU, f32 acc) instead of re-projecting
        # them for every query tile inside the kernel.
        kp = jnp.dot(keys.astype(compute_dtype), wk_blk,
                     preferred_element_type=jnp.float32).astype(compute_dtype)
        vp = jnp.dot(values.astype(compute_dtype), wv_blk,
                     preferred_element_type=jnp.float32).astype(compute_dtype)
        inputs = (bias_p, q_in, kp, vp, wq_blk, wfc_t, bfc2)
        in_specs = [bias_spec, q_spec, kv_spec, kv_spec,
                    w_spec(embed_size, embed_size),
                    w_spec(embed_size, embed_size),
                    w_spec(1, embed_size)]

    kernel = functools.partial(_mhsa_kernel, heads=heads, head_dim=head_dim,
                               mode=mode)

    out = pl.pallas_call(
        kernel,
        out_shape=jax.ShapeDtypeStruct((N, padded_q, embed_size), out_dtype),
        grid_spec=pltpu.PrefetchScalarGridSpec(
            num_scalar_prefetch=0,
            grid=(N, n_q),
            in_specs=in_specs,
            out_specs=pl.BlockSpec((1, block_q, embed_size),
                                   lambda n, qi: (n, qi, 0)),
            scratch_shapes=[pltpu.VMEM((block_q, embed_size), jnp.float32)],
        ),
        compiler_params=pltpu.CompilerParams(
            dimension_semantics=("parallel", "parallel"),
            vmem_limit_bytes=vmem_limit,
        ),
    )(*inputs)

    return out[:, :q_len] if q_pad else out


def _reference(values, keys, queries, mask, params, *, embed_size, heads):
    """Pure-JAX f32 mirror of the PyTorch forward, for validation."""
    head_dim = embed_size // heads
    wv, wk, wq, wfc, bfc = params
    N, q_len, _ = queries.shape
    v = values.reshape(N, -1, heads, head_dim) @ wv.T
    k = keys.reshape(N, -1, heads, head_dim) @ wk.T
    q = queries.reshape(N, -1, heads, head_dim) @ wq.T
    energy = jnp.einsum('nqhd,nkhd->nhqk', q, k)
    if mask is not None:
        energy = jnp.where(mask == 0, -jnp.inf, energy)
    attn = jax.nn.softmax(energy / (embed_size ** 0.5), axis=3)
    out = jnp.einsum('nhql,nlhd->nqhd', attn, v).reshape(N, q_len, heads * head_dim)
    return out @ wfc.T + bfc


if __name__ == "__main__":
    E, H = 32, 4
    D = E // H

    key = jax.random.PRNGKey(0)
    kv, kk, kq, kwv, kwk, kwq, kwfc, kbfc, km1, km2, kx = jax.random.split(key, 11)

    # PyTorch Linear weight shape convention: (out, in).
    s_hd = 1.0 / math.sqrt(D)
    s_e = 1.0 / math.sqrt(E)
    params = (
        jax.random.uniform(kwv, (D, D), jnp.float32, -s_hd, s_hd),   # values.weight
        jax.random.uniform(kwk, (D, D), jnp.float32, -s_hd, s_hd),   # keys.weight
        jax.random.uniform(kwq, (D, D), jnp.float32, -s_hd, s_hd),   # queries.weight
        jax.random.uniform(kwfc, (E, E), jnp.float32, -s_e, s_e),    # fc_out.weight
        jax.random.uniform(kbfc, (E,), jnp.float32, -s_e, s_e),      # fc_out.bias
    )

    ok = True

    # 1) Cross-attention, padding mask (N,1,1,Lk): "separate" path, n_q == 1.
    N, L = 2, 8
    values = jax.random.normal(kv, (N, L, E), jnp.float32)
    keys_in = jax.random.normal(kk, (N, L, E), jnp.float32)
    queries = jax.random.normal(kq, (N, L, E), jnp.float32)
    mask = (jax.random.uniform(km1, (N, 1, 1, L)) > 0.3).astype(jnp.int32)
    mask = mask.at[..., 0].set(1)          # avoid fully-masked rows
    out1 = jax.block_until_ready(
        multi_head_self_attention(values, keys_in, queries, mask, params,
                                  embed_size=E, heads=H))
    ref1 = _reference(values, keys_in, queries, mask, params, embed_size=E, heads=H)
    ok &= bool(jnp.allclose(out1, ref1, atol=3e-2, rtol=3e-2))

    # 2) Self-attention fast path (q is k is v): fused (E, 3E) projection.
    x = jax.random.normal(kx, (N, L, E), jnp.float32)
    out2 = jax.block_until_ready(
        multi_head_self_attention(x, x, x, mask, params, embed_size=E, heads=H))
    ref2 = _reference(x, x, x, mask, params, embed_size=E, heads=H)
    ok &= bool(jnp.allclose(out2, ref2, atol=3e-2, rtol=3e-2))

    # 3) Tiled queries (block_q=8, q_len=12 -> padded to 16) with an
    #    attention-shaped mask (N,1,Lq,Lk): "preprojected" K/V path.
    q_len, k_len = 12, 16
    values3 = jax.random.normal(kv, (N, k_len, E), jnp.float32)
    keys3 = jax.random.normal(kk, (N, k_len, E), jnp.float32)
    queries3 = jax.random.normal(kq, (N, q_len, E), jnp.float32)
    mask3 = (jax.random.uniform(km2, (N, 1, q_len, k_len)) > 0.3).astype(jnp.int32)
    mask3 = mask3.at[..., 0].set(1)
    out3 = jax.block_until_ready(
        multi_head_self_attention(values3, keys3, queries3, mask3, params,
                                  embed_size=E, heads=H, block_q=8))
    ref3 = _reference(values3, keys3, queries3, mask3, params, embed_size=E, heads=H)
    ok &= bool(jnp.allclose(out3, ref3, atol=3e-2, rtol=3e-2))

    assert out1.shape == (N, L, E) and out2.shape == (N, L, E)
    assert out3.shape == (N, q_len, E)
    # Tolerance accounts for bf16 MXU operands (f32 accumulation in-kernel).
    assert ok, "mismatch vs reference"

    print("KERNEL_OK")
</pallas_src>

<mosaic_0001>
module attributes {stable_mosaic.version = 11 : i64} {
  func.func @_mhsa_kernel(%arg0: i32, %arg1: i32, %arg2: memref<1x1x8xf32, #tpu.memory_space<vmem>>, %arg3: memref<1x8x32xbf16, #tpu.memory_space<vmem>>, %arg4: memref<1x8x32xbf16, #tpu.memory_space<vmem>>, %arg5: memref<1x8x32xbf16, #tpu.memory_space<vmem>>, %arg6: memref<32x32xbf16, #tpu.memory_space<vmem>>, %arg7: memref<32x32xbf16, #tpu.memory_space<vmem>>, %arg8: memref<32x32xbf16, #tpu.memory_space<vmem>>, %arg9: memref<32x32xbf16, #tpu.memory_space<vmem>>, %arg10: memref<1x32xf32, #tpu.memory_space<vmem>>, %arg11: memref<1x8x32xf32, #tpu.memory_space<vmem>>, %arg12: memref<8x32xf32, #tpu.memory_space<vmem>>) attributes {dimension_semantics = [#tpu.dimension_semantics<parallel>, #tpu.dimension_semantics<parallel>], iteration_bounds = array<i64: 2, 1>, scalar_prefetch = 0 : i64, scratch_operands = 1 : i64, tpu.core_type = #tpu.core_type<tc>, window_params = [{transform_indices = @transform_0, window_bounds = array<i64: 1, 1, 8>}, {transform_indices = @transform_1, window_bounds = array<i64: 1, 8, 32>}, {transform_indices = @transform_2, window_bounds = array<i64: 1, 8, 32>}, {transform_indices = @transform_3, window_bounds = array<i64: 1, 8, 32>}, {pipeline_mode = #tpu.pipeline_mode<synchronous>, transform_indices = @transform_4, window_bounds = array<i64: 32, 32>}, {pipeline_mode = #tpu.pipeline_mode<synchronous>, transform_indices = @transform_5, window_bounds = array<i64: 32, 32>}, {pipeline_mode = #tpu.pipeline_mode<synchronous>, transform_indices = @transform_6, window_bounds = array<i64: 32, 32>}, {pipeline_mode = #tpu.pipeline_mode<synchronous>, transform_indices = @transform_7, window_bounds = array<i64: 32, 32>}, {pipeline_mode = #tpu.pipeline_mode<synchronous>, transform_indices = @transform_8, window_bounds = array<i64: 1, 32>}, {transform_indices = @transform_9, window_bounds = array<i64: 1, 8, 32>}]} {
    %c0 = arith.constant 0 : index
    %c0_0 = arith.constant 0 : index
    %c0_1 = arith.constant 0 : index
    %0 = vector.load %arg3[%c0, %c0_0, %c0_1] : memref<1x8x32xbf16, #tpu.memory_space<vmem>>, vector<1x8x32xbf16>
    %1 = vector.shape_cast %0 : vector<1x8x32xbf16> to vector<8x32xbf16>
    %c0_2 = arith.constant 0 : index
    %c0_3 = arith.constant 0 : index
    %2 = vector.load %arg6[%c0_2, %c0_3] : memref<32x32xbf16, #tpu.memory_space<vmem>>, vector<32x32xbf16>
    %cst = arith.constant dense<0.000000e+00> : vector<8x32xf32>
    %3 = tpu.matmul %1, %2, %cst {dimension_numbers = #tpu.dot_dimension_numbers<[1], [0], [0], [1], [0, 0, 1, 1], [], []>} : vector<8x32xbf16>, vector<32x32xbf16>, vector<8x32xf32> -> vector<8x32xf32>
    %4 = arith.truncf %3 : vector<8x32xf32> to vector<8x32xbf16>
    %c0_4 = arith.constant 0 : index
    %c0_5 = arith.constant 0 : index
    %c0_6 = arith.constant 0 : index
    %5 = vector.load %arg4[%c0_4, %c0_5, %c0_6] : memref<1x8x32xbf16, #tpu.memory_space<vmem>>, vector<1x8x32xbf16>
    %6 = vector.shape_cast %5 : vector<1x8x32xbf16> to vector<8x32xbf16>
    %c0_7 = arith.constant 0 : index
    %c0_8 = arith.constant 0 : index
    %7 = vector.load %arg7[%c0_7, %c0_8] : memref<32x32xbf16, #tpu.memory_space<vmem>>, vector<32x32xbf16>
    %cst_9 = arith.constant dense<0.000000e+00> : vector<8x32xf32>
    %8 = tpu.matmul %6, %7, %cst_9 {dimension_numbers = #tpu.dot_dimension_numbers<[1], [0], [0], [1], [0, 0, 1, 1], [], []>} : vector<8x32xbf16>, vector<32x32xbf16>, vector<8x32xf32> -> vector<8x32xf32>
    %9 = arith.truncf %8 : vector<8x32xf32> to vector<8x32xbf16>
    %c0_10 = arith.constant 0 : index
    %c0_11 = arith.constant 0 : index
    %c0_12 = arith.constant 0 : index
    %10 = vector.load %arg5[%c0_10, %c0_11, %c0_12] : memref<1x8x32xbf16, #tpu.memory_space<vmem>>, vector<1x8x32xbf16>
    %11 = vector.shape_cast %10 : vector<1x8x32xbf16> to vector<8x32xbf16>
    %c0_13 = arith.constant 0 : index
    %c0_14 = arith.constant 0 : index
    %12 = vector.load %arg8[%c0_13, %c0_14] : memref<32x32xbf16, #tpu.memory_space<vmem>>, vector<32x32xbf16>
    %cst_15 = arith.constant dense<0.000000e+00> : vector<8x32xf32>
    %13 = tpu.matmul %11, %12, %cst_15 {dimension_numbers = #tpu.dot_dimension_numbers<[1], [0], [0], [1], [0, 0, 1, 1], [], []>} : vector<8x32xbf16>, vector<32x32xbf16>, vector<8x32xf32> -> vector<8x32xf32>
    %14 = arith.truncf %13 : vector<8x32xf32> to vector<8x32xbf16>
    %c0_16 = arith.constant 0 : index
    %c0_17 = arith.constant 0 : index
    %c0_18 = arith.constant 0 : index
    %15 = vector.load %arg2[%c0_16, %c0_17, %c0_18] : memref<1x1x8xf32, #tpu.memory_space<vmem>>, vector<1x1x8xf32>
    %16 = vector.shape_cast %15 : vector<1x1x8xf32> to vector<1x8xf32>
    %17 = vector.extract_strided_slice %4 {offsets = [0, 0], sizes = [8, 8], strides = [1, 1]} : vector<8x32xbf16> to vector<8x8xbf16>
    %18 = vector.extract_strided_slice %9 {offsets = [0, 0], sizes = [8, 8], strides = [1, 1]} : vector<8x32xbf16> to vector<8x8xbf16>
    %19 = vector.extract_strided_slice %14 {offsets = [0, 0], sizes = [8, 8], strides = [1, 1]} : vector<8x32xbf16> to vector<8x8xbf16>
    %cst_19 = arith.constant dense<0.000000e+00> : vector<8x8xf32>
    %20 = tpu.matmul %17, %18, %cst_19 {dimension_numbers = #tpu.dot_dimension_numbers<[1], [1], [0], [0], [0, 0, 1, 0], [], []>} : vector<8x8xbf16>, vector<8x8xbf16>, vector<8x8xf32> -> vector<8x8xf32>
    %21 = vector.broadcast %16 : vector<1x8xf32> to vector<8x8xf32>
    %22 = arith.addf %20, %21 : vector<8x8xf32>
    %cst_20 = arith.constant dense<0xFF800000> : vector<8xf32>
    %23 = vector.multi_reduction <maximumf>, %22, %cst_20 [1] : vector<8x8xf32> to vector<8xf32>
    %24 = vector.shape_cast %23 : vector<8xf32> to vector<8x1xf32>
    %25 = vector.broadcast %24 : vector<8x1xf32> to vector<8x8xf32>
    %26 = arith.subf %22, %25 : vector<8x8xf32>
    %27 = math.exp %26 : vector<8x8xf32>
    %cst_21 = arith.constant dense<0.000000e+00> : vector<8xf32>
    %28 = vector.multi_reduction <add>, %27, %cst_21 [1] : vector<8x8xf32> to vector<8xf32>
    %29 = vector.shape_cast %28 : vector<8xf32> to vector<8x1xf32>
    %30 = arith.truncf %27 : vector<8x8xf32> to vector<8x8xbf16>
    %cst_22 = arith.constant dense<0.000000e+00> : vector<8x8xf32>
    %31 = tpu.matmul %30, %19, %cst_22 {dimension_numbers = #tpu.dot_dimension_numbers<[1], [0], [0], [1], [0, 0, 1, 1], [], []>} : vector<8x8xbf16>, vector<8x8xbf16>, vector<8x8xf32> -> vector<8x8xf32>
    %32 = tpu.reciprocal %29 : vector<8x1xf32> -> vector<8x1xf32>
    %33 = vector.broadcast %32 : vector<8x1xf32> to vector<8x8xf32>
    %34 = arith.mulf %31, %33 : vector<8x8xf32>
    %35 = arith.truncf %34 : vector<8x8xf32> to vector<8x8xbf16>
    %c0_23 = arith.constant 0 : index
    %c0_24 = arith.constant 0 : index
    %36 = vector.load %arg9[%c0_23, %c0_24] : memref<32x32xbf16, #tpu.memory_space<vmem>>, vector<8x32xbf16>
    %cst_25 = arith.constant dense<0.000000e+00> : vector<8x32xf32>
    %37 = tpu.matmul %35, %36, %cst_25 {dimension_numbers = #tpu.dot_dimension_numbers<[1], [0], [0], [1], [0, 0, 1, 1], [], []>} : vector<8x8xbf16>, vector<8x32xbf16>, vector<8x32xf32> -> vector<8x32xf32>
    %c0_26 = arith.constant 0 : index
    %c0_27 = arith.constant 0 : index
    %38 = vector.load %arg12[%c0_26, %c0_27] : memref<8x32xf32, #tpu.memory_space<vmem>>, vector<8x32xf32>
    tpu.vector_store %arg12[%c0_26, %c0_27], %37 {strides = array<i32>} : memref<8x32xf32, #tpu.memory_space<vmem>>, vector<8x32xf32>,
    %39 = vector.extract_strided_slice %4 {offsets = [0, 8], sizes = [8, 8], strides = [1, 1]} : vector<8x32xbf16> to vector<8x8xbf16>
    %40 = vector.extract_strided_slice %9 {offsets = [0, 8], sizes = [8, 8], strides = [1, 1]} : vector<8x32xbf16> to vector<8x8xbf16>
    %41 = vector.extract_strided_slice %14 {offsets = [0, 8], sizes = [8, 8], strides = [1, 1]} : vector<8x32xbf16> to vector<8x8xbf16>
    %cst_28 = arith.constant dense<0.000000e+00> : vector<8x8xf32>
    %42 = tpu.matmul %39, %40, %cst_28 {dimension_numbers = #tpu.dot_dimension_numbers<[1], [1], [0], [0], [0, 0, 1, 0], [], []>} : vector<8x8xbf16>, vector<8x8xbf16>, vector<8x8xf32> -> vector<8x8xf32>
    %43 = vector.broadcast %16 : vector<1x8xf32> to vector<8x8xf32>
    %44 = arith.addf %42, %43 : vector<8x8xf32>
    %cst_29 = arith.constant dense<0xFF800000> : vector<8xf32>
    %45 = vector.multi_reduction <maximumf>, %44, %cst_29 [1] : vector<8x8xf32> to vector<8xf32>
    %46 = vector.shape_cast %45 : vector<8xf32> to vector<8x1xf32>
    %47 = vector.broadcast %46 : vector<8x1xf32> to vector<8x8xf32>
    %48 = arith.subf %44, %47 : vector<8x8xf32>
    %49 = math.exp %48 : vector<8x8xf32>
    %cst_30 = arith.constant dense<0.000000e+00> : vector<8xf32>
    %50 = vector.multi_reduction <add>, %49, %cst_30 [1] : vector<8x8xf32> to vector<8xf32>
    %51 = vector.shape_cast %50 : vector<8xf32> to vector<8x1xf32>
    %52 = arith.truncf %49 : vector<8x8xf32> to vector<8x8xbf16>
    %cst_31 = arith.constant dense<0.000000e+00> : vector<8x8xf32>
    %53 = tpu.matmul %52, %41, %cst_31 {dimension_numbers = #tpu.dot_dimension_numbers<[1], [0], [0], [1], [0, 0, 1, 1], [], []>} : vector<8x8xbf16>, vector<8x8xbf16>, vector<8x8xf32> -> vector<8x8xf32>
    %54 = tpu.reciprocal %51 : vector<8x1xf32> -> vector<8x1xf32>
    %55 = vector.broadcast %54 : vector<8x1xf32> to vector<8x8xf32>
    %56 = arith.mulf %53, %55 : vector<8x8xf32>
    %57 = arith.truncf %56 : vector<8x8xf32> to vector<8x8xbf16>
    %c8 = arith.constant 8 : index
    %c0_32 = arith.constant 0 : index
    %58 = vector.load %arg9[%c8, %c0_32] : memref<32x32xbf16, #tpu.memory_space<vmem>>, vector<8x32xbf16>
    %cst_33 = arith.constant dense<0.000000e+00> : vector<8x32xf32>
    %59 = tpu.matmul %57, %58, %cst_33 {dimension_numbers = #tpu.dot_dimension_numbers<[1], [0], [0], [1], [0, 0, 1, 1], [], []>} : vector<8x8xbf16>, vector<8x32xbf16>, vector<8x32xf32> -> vector<8x32xf32>
    %c0_34 = arith.constant 0 : index
    %c0_35 = arith.constant 0 : index
    %60 = vector.load %arg12[%c0_34, %c0_35] : memref<8x32xf32, #tpu.memory_space<vmem>>, vector<8x32xf32>
    %61 = arith.addf %60, %59 : vector<8x32xf32>
    %c0_36 = arith.constant 0 : index
    %c0_37 = arith.constant 0 : index
    %62 = vector.load %arg12[%c0_36, %c0_37] : memref<8x32xf32, #tpu.memory_space<vmem>>, vector<8x32xf32>
    tpu.vector_store %arg12[%c0_36, %c0_37], %61 {strides = array<i32>} : memref<8x32xf32, #tpu.memory_space<vmem>>, vector<8x32xf32>,
    %63 = vector.extract_strided_slice %4 {offsets = [0, 16], sizes = [8, 8], strides = [1, 1]} : vector<8x32xbf16> to vector<8x8xbf16>
    %64 = vector.extract_strided_slice %9 {offsets = [0, 16], sizes = [8, 8], strides = [1, 1]} : vector<8x32xbf16> to vector<8x8xbf16>
    %65 = vector.extract_strided_slice %14 {offsets = [0, 16], sizes = [8, 8], strides = [1, 1]} : vector<8x32xbf16> to vector<8x8xbf16>
    %cst_38 = arith.constant dense<0.000000e+00> : vector<8x8xf32>
    %66 = tpu.matmul %63, %64, %cst_38 {dimension_numbers = #tpu.dot_dimension_numbers<[1], [1], [0], [0], [0, 0, 1, 0], [], []>} : vector<8x8xbf16>, vector<8x8xbf16>, vector<8x8xf32> -> vector<8x8xf32>
    %67 = vector.broadcast %16 : vector<1x8xf32> to vector<8x8xf32>
    %68 = arith.addf %66, %67 : vector<8x8xf32>
    %cst_39 = arith.constant dense<0xFF800000> : vector<8xf32>
    %69 = vector.multi_reduction <maximumf>, %68, %cst_39 [1] : vector<8x8xf32> to vector<8xf32>
    %70 = vector.shape_cast %69 : vector<8xf32> to vector<8x1xf32>
    %71 = vector.broadcast %70 : vector<8x1xf32> to vector<8x8xf32>
    %72 = arith.subf %68, %71 : vector<8x8xf32>
    %73 = math.exp %72 : vector<8x8xf32>
    %cst_40 = arith.constant dense<0.000000e+00> : vector<8xf32>
    %74 = vector.multi_reduction <add>, %73, %cst_40 [1] : vector<8x8xf32> to vector<8xf32>
    %75 = vector.shape_cast %74 : vector<8xf32> to vector<8x1xf32>
    %76 = arith.truncf %73 : vector<8x8xf32> to vector<8x8xbf16>
    %cst_41 = arith.constant dense<0.000000e+00> : vector<8x8xf32>
    %77 = tpu.matmul %76, %65, %cst_41 {dimension_numbers = #tpu.dot_dimension_numbers<[1], [0], [0], [1], [0, 0, 1, 1], [], []>} : vector<8x8xbf16>, vector<8x8xbf16>, vector<8x8xf32> -> vector<8x8xf32>
    %78 = tpu.reciprocal %75 : vector<8x1xf32> -> vector<8x1xf32>
    %79 = vector.broadcast %78 : vector<8x1xf32> to vector<8x8xf32>
    %80 = arith.mulf %77, %79 : vector<8x8xf32>
    %81 = arith.truncf %80 : vector<8x8xf32> to vector<8x8xbf16>
    %c16 = arith.constant 16 : index
    %c0_42 = arith.constant 0 : index
    %82 = vector.load %arg9[%c16, %c0_42] : memref<32x32xbf16, #tpu.memory_space<vmem>>, vector<8x32xbf16>
    %cst_43 = arith.constant dense<0.000000e+00> : vector<8x32xf32>
    %83 = tpu.matmul %81, %82, %cst_43 {dimension_numbers = #tpu.dot_dimension_numbers<[1], [0], [0], [1], [0, 0, 1, 1], [], []>} : vector<8x8xbf16>, vector<8x32xbf16>, vector<8x32xf32> -> vector<8x32xf32>
    %c0_44 = arith.constant 0 : index
    %c0_45 = arith.constant 0 : index
    %84 = vector.load %arg12[%c0_44, %c0_45] : memref<8x32xf32, #tpu.memory_space<vmem>>, vector<8x32xf32>
    %85 = arith.addf %84, %83 : vector<8x32xf32>
    %c0_46 = arith.constant 0 : index
    %c0_47 = arith.constant 0 : index
    %86 = vector.load %arg12[%c0_46, %c0_47] : memref<8x32xf32, #tpu.memory_space<vmem>>, vector<8x32xf32>
    tpu.vector_store %arg12[%c0_46, %c0_47], %85 {strides = array<i32>} : memref<8x32xf32, #tpu.memory_space<vmem>>, vector<8x32xf32>,
    %87 = vector.extract_strided_slice %4 {offsets = [0, 24], sizes = [8, 8], strides = [1, 1]} : vector<8x32xbf16> to vector<8x8xbf16>
    %88 = vector.extract_strided_slice %9 {offsets = [0, 24], sizes = [8, 8], strides = [1, 1]} : vector<8x32xbf16> to vector<8x8xbf16>
    %89 = vector.extract_strided_slice %14 {offsets = [0, 24], sizes = [8, 8], strides = [1, 1]} : vector<8x32xbf16> to vector<8x8xbf16>
    %cst_48 = arith.constant dense<0.000000e+00> : vector<8x8xf32>
    %90 = tpu.matmul %87, %88, %cst_48 {dimension_numbers = #tpu.dot_dimension_numbers<[1], [1], [0], [0], [0, 0, 1, 0], [], []>} : vector<8x8xbf16>, vector<8x8xbf16>, vector<8x8xf32> -> vector<8x8xf32>
    %91 = vector.broadcast %16 : vector<1x8xf32> to vector<8x8xf32>
    %92 = arith.addf %90, %91 : vector<8x8xf32>
    %cst_49 = arith.constant dense<0xFF800000> : vector<8xf32>
    %93 = vector.multi_reduction <maximumf>, %92, %cst_49 [1] : vector<8x8xf32> to vector<8xf32>
    %94 = vector.shape_cast %93 : vector<8xf32> to vector<8x1xf32>
    %95 = vector.broadcast %94 : vector<8x1xf32> to vector<8x8xf32>
    %96 = arith.subf %92, %95 : vector<8x8xf32>
    %97 = math.exp %96 : vector<8x8xf32>
    %cst_50 = arith.constant dense<0.000000e+00> : vector<8xf32>
    %98 = vector.multi_reduction <add>, %97, %cst_50 [1] : vector<8x8xf32> to vector<8xf32>
    %99 = vector.shape_cast %98 : vector<8xf32> to vector<8x1xf32>
    %100 = arith.truncf %97 : vector<8x8xf32> to vector<8x8xbf16>
    %cst_51 = arith.constant dense<0.000000e+00> : vector<8x8xf32>
    %101 = tpu.matmul %100, %89, %cst_51 {dimension_numbers = #tpu.dot_dimension_numbers<[1], [0], [0], [1], [0, 0, 1, 1], [], []>} : vector<8x8xbf16>, vector<8x8xbf16>, vector<8x8xf32> -> vector<8x8xf32>
    %102 = tpu.reciprocal %99 : vector<8x1xf32> -> vector<8x1xf32>
    %103 = vector.broadcast %102 : vector<8x1xf32> to vector<8x8xf32>
    %104 = arith.mulf %101, %103 : vector<8x8xf32>
    %105 = arith.truncf %104 : vector<8x8xf32> to vector<8x8xbf16>
    %c24 = arith.constant 24 : index
    %c0_52 = arith.constant 0 : index
    %106 = vector.load %arg9[%c24, %c0_52] : memref<32x32xbf16, #tpu.memory_space<vmem>>, vector<8x32xbf16>
    %cst_53 = arith.constant dense<0.000000e+00> : vector<8x32xf32>
    %107 = tpu.matmul %105, %106, %cst_53 {dimension_numbers = #tpu.dot_dimension_numbers<[1], [0], [0], [1], [0, 0, 1, 1], [], []>} : vector<8x8xbf16>, vector<8x32xbf16>, vector<8x32xf32> -> vector<8x32xf32>
    %c0_54 = arith.constant 0 : index
    %c0_55 = arith.constant 0 : index
    %108 = vector.load %arg12[%c0_54, %c0_55] : memref<8x32xf32, #tpu.memory_space<vmem>>, vector<8x32xf32>
    %109 = arith.addf %108, %107 : vector<8x32xf32>
    %c0_56 = arith.constant 0 : index
    %c0_57 = arith.constant 0 : index
    %110 = vector.load %arg12[%c0_56, %c0_57] : memref<8x32xf32, #tpu.memory_space<vmem>>, vector<8x32xf32>
    tpu.vector_store %arg12[%c0_56, %c0_57], %109 {strides = array<i32>} : memref<8x32xf32, #tpu.memory_space<vmem>>, vector<8x32xf32>,
    %c0_58 = arith.constant 0 : index
    %c0_59 = arith.constant 0 : index
    %111 = vector.load %arg12[%c0_58, %c0_59] : memref<8x32xf32, #tpu.memory_space<vmem>>, vector<8x32xf32>
    %c0_60 = arith.constant 0 : index
    %c0_61 = arith.constant 0 : index
    %112 = vector.load %arg10[%c0_60, %c0_61] : memref<1x32xf32, #tpu.memory_space<vmem>>, vector<1x32xf32>
    %113 = vector.broadcast %112 : vector<1x32xf32> to vector<8x32xf32>
    %114 = arith.addf %111, %113 : vector<8x32xf32>
    %c0_62 = arith.constant 0 : index
    %c0_63 = arith.constant 0 : index
    %c0_64 = arith.constant 0 : index
    %115 = vector.load %arg11[%c0_62, %c0_63, %c0_64] : memref<1x8x32xf32, #tpu.memory_space<vmem>>, vector<1x8x32xf32>
    %116 = vector.shape_cast %115 : vector<1x8x32xf32> to vector<8x32xf32>
    %117 = vector.shape_cast %114 : vector<8x32xf32> to vector<1x8x32xf32>
    tpu.vector_store %arg11[%c0_62, %c0_63, %c0_64], %117 {strides = array<i32>} : memref<1x8x32xf32, #tpu.memory_space<vmem>>, vector<1x8x32xf32>,
    return
  }
  func.func @transform_0(%arg0: i32, %arg1: i32) -> (i32, i32, i32) {
    %c0_i32 = arith.constant 0 : i32
    %c0_i32_0 = arith.constant 0 : i32
    %c0_i32_1 = arith.constant 0 : i32
    return %arg0, %c0_i32, %c0_i32_0 : i32, i32, i32
  }
  func.func @transform_1(%arg0: i32, %arg1: i32) -> (i32, i32, i32) {
    %c0_i32 = arith.constant 0 : i32
    %c0_i32_0 = arith.constant 0 : i32
    return %arg0, %arg1, %c0_i32 : i32, i32, i32
  }
  func.func @transform_2(%arg0: i32, %arg1: i32) -> (i32, i32, i32) {
    %c0_i32 = arith.constant 0 : i32
    %c0_i32_0 = arith.constant 0 : i32
    %c0_i32_1 = arith.constant 0 : i32
    return %arg0, %c0_i32, %c0_i32_0 : i32, i32, i32
  }
  func.func @transform_3(%arg0: i32, %arg1: i32) -> (i32, i32, i32) {
    %c0_i32 = arith.constant 0 : i32
    %c0_i32_0 = arith.constant 0 : i32
    %c0_i32_1 = arith.constant 0 : i32
    return %arg0, %c0_i32, %c0_i32_0 : i32, i32, i32
  }
  func.func @transform_4(%arg0: i32, %arg1: i32) -> (i32, i32) {
    %c0_i32 = arith.constant 0 : i32
    %c0_i32_0 = arith.constant 0 : i32
    %c0_i32_1 = arith.constant 0 : i32
    return %c0_i32, %c0_i32_0 : i32, i32
  }
  func.func @transform_5(%arg0: i32, %arg1: i32) -> (i32, i32) {
    %c0_i32 = arith.constant 0 : i32
    %c0_i32_0 = arith.constant 0 : i32
    %c0_i32_1 = arith.constant 0 : i32
    return %c0_i32, %c0_i32_0 : i32, i32
  }
  func.func @transform_6(%arg0: i32, %arg1: i32) -> (i32, i32) {
    %c0_i32 = arith.constant 0 : i32
    %c0_i32_0 = arith.constant 0 : i32
    %c0_i32_1 = arith.constant 0 : i32
    return %c0_i32, %c0_i32_0 : i32, i32
  }
  func.func @transform_7(%arg0: i32, %arg1: i32) -> (i32, i32) {
    %c0_i32 = arith.constant 0 : i32
    %c0_i32_0 = arith.constant 0 : i32
    %c0_i32_1 = arith.constant 0 : i32
    return %c0_i32, %c0_i32_0 : i32, i32
  }
  func.func @transform_8(%arg0: i32, %arg1: i32) -> (i32, i32) {
    %c0_i32 = arith.constant 0 : i32
    %c0_i32_0 = arith.constant 0 : i32
    %c0_i32_1 = arith.constant 0 : i32
    return %c0_i32, %c0_i32_0 : i32, i32
  }
  func.func @transform_9(%arg0: i32, %arg1: i32) -> (i32, i32, i32) {
    %c0_i32 = arith.constant 0 : i32
    %c0_i32_0 = arith.constant 0 : i32
    return %arg0, %arg1, %c0_i32 : i32, i32, i32
  }
}

</mosaic_0001>

<llo_original>
// kernel: tpu_custom_call.1
$region0: #{tpu_custom_call.1}
  #allocation0 [shape = 'u32[]', space=smem, size = 0x4, offset = 0x4, fixed_abs, tag = 'smem constant byte address 0x4 - core index']
  #allocation1 [shape = 'u32[144,128]{1,0:T(1,128)}', space=vmem, size = 0x12000, scoped, tag = 'internal scratch']
  #allocation2 [shape = 'f32[8,32]{1,0:T(8,128)}', space=vmem, size = 0x1000, scoped, tag = 'scratch operand']
  %s0 = inlined_call_operand.hbm [shape: f32[2,1,8], index: 0, kind: input, shape index: {}]
  %s1 = inlined_call_operand.hbm [shape: bf16[2,8,32], index: 1, kind: input, shape index: {}]
  %s2 = inlined_call_operand.hbm [shape: bf16[2,8,32], index: 2, kind: input, shape index: {}]
  %s3 = inlined_call_operand.hbm [shape: bf16[2,8,32], index: 3, kind: input, shape index: {}]
  %s4 = inlined_call_operand.hbm [shape: bf16[32,32], index: 4, kind: input, shape index: {}]
  %s5 = inlined_call_operand.vmem [shape: bf16[32,32], index: 5, kind: input, shape index: {}]
  %s6 = inlined_call_operand.hbm [shape: bf16[32,32], index: 6, kind: input, shape index: {}]
  %s7 = inlined_call_operand.hbm [shape: bf16[32,32], index: 7, kind: input, shape index: {}]
  %s8 = inlined_call_operand.vmem [shape: f32[1,32], index: 8, kind: input, shape index: {}]
  %s9 = inlined_call_operand.hbm [shape: f32[2,8,32], index: 9, kind: output, shape index: {}]
  %s10 = sld [smem:[#allocation0]]
  $region97: #{tpu_custom_call.1} parent=0
    _
  %s12 = ssub.s32 1, %s10
  %s13 = scalar_select 0, %s12, %s10
  $region1: #{tpu_custom_call.1} parent=0
    #allocation3 [shape = 'u8[1024]{0}', space=vmem, size = 0x400, scoped, tag = 'input window, operand 0']
    #allocation4 [shape = 's32[2]{0}', space=sflag, size = 0x8, scoped, tag = 'scoped memory for tpu_custom_call.1']
    #allocation5 [shape = 's32[2]{0}', space=sflag, size = 0x8, scoped, tag = 'scoped memory for tpu_custom_call.1']
    #allocation6 [shape = 'u8[4096]{0}', space=vmem, size = 0x1000, scoped, tag = 'input window, operand 1']
    #allocation7 [shape = 's32[2]{0}', space=sflag, size = 0x8, scoped, tag = 'scoped memory for tpu_custom_call.1']
    #allocation8 [shape = 'u8[4096]{0}', space=vmem, size = 0x1000, scoped, tag = 'input window, operand 2']
    #allocation9 [shape = 'u8[4096]{0}', space=vmem, size = 0x1000, scoped, tag = 'input window, operand 3']
    #allocation10 [shape = 's32[2]{0}', space=sflag, size = 0x8, scoped, tag = 'scoped memory for tpu_custom_call.1']
    #allocation11 [shape = 'u8[8192]{0}', space=vmem, size = 0x2000, scoped, tag = 'input window, operand 4, single buffered']
    #allocation12 [shape = 'u8[8192]{0}', space=vmem, size = 0x2000, scoped, tag = 'input window, operand 6, single buffered']
    #allocation13 [shape = 's32[1]{0}', space=sflag, size = 0x4, scoped, tag = 'scoped memory for tpu_custom_call.1']
    #allocation14 [shape = 'u8[8192]{0}', space=vmem, size = 0x2000, scoped, tag = 'input window, operand 7, single buffered']
    #allocation15 [shape = 'u8[8192]{0}', space=vmem, size = 0x2000, scoped, tag = 'output window, operand 0']
    %14 = vsyncpa [#allocation4], 0
    %s15 = scalar_lea.sflag [#allocation4], 1
    %16 = vsyncpa %s15, 0
    %17 = vsyncpa [#allocation7], 0
    %s18 = scalar_lea.sflag [#allocation7], 1
    %19 = vsyncpa %s18, 0
    %20 = vsyncpa [#allocation10], 0
    %s21 = scalar_lea.sflag [#allocation10], 1
    %22 = vsyncpa %s21, 0
    %23 = vsyncpa [#allocation13], 0
    %24 = vsyncpa [#allocation5], 0
    %s25 = scalar_lea.sflag [#allocation5], 1
    %26 = vsyncpa %s25, 0
    loop: start=0, step=1, limit=4
    $region2: #{tpu_custom_call.1} parent=1 // loop_pre_header
      _
    $region3: #{tpu_custom_call.1} parent=1 // loop_header
      %s28 = sphi 0, %s32
      %p29 = scmp.ge.s32.totalorder %s28, 4
      %s35 = sphi 0, %s47
      %s36 = sphi 0, %s43
      %s37 = sphi 0, %s35
      %s38 = sphi 0, %s36
      %s39 = sphi 0, %s37
      %s40 = sphi 0, %s38
      %s50 = sphi 0, %s52
      %s53 = sphi 0, %s50
      %s54 = sphi 0, %s53
      %s70 = sphi 0, %s54
      %s78 = sphi 0, %s80
      %s81 = sphi 0, %s78
      %s82 = sphi 0, %s81
      %s98 = sphi 0, %s82
      %s104 = sphi 0, %s106
      %s107 = sphi 0, %s104
      %s108 = sphi 0, %s107
      %s124 = sphi 0, %s108
      %s130 = sphi 0, %s132
      %s133 = sphi 0, %s130
      %s134 = sphi 0, %s133
      %s150 = sphi 0, %s134
      %s154 = sphi 0, %s154
      %s156 = sphi 0, %s154
      %s157 = sphi 0, %s156
      %s171 = sphi 0, %s157
      %s175 = sphi 0, %s175
      %s177 = sphi 0, %s175
      %s178 = sphi 0, %s177
      %s192 = sphi 0, %s178
      %s196 = sphi 0, %s196
      %s198 = sphi 0, %s196
      %s199 = sphi 0, %s198
      %s213 = sphi 0, %s199
      %s217 = sphi 0, %s217
      %s219 = sphi 0, %s217
      %s220 = sphi 0, %s219
      %s234 = sphi 0, %s220
      %s238 = sphi 0, %s238
      %s240 = sphi 0, %s238
      %s241 = sphi 0, %s240
      %s255 = sphi 0, %s241
      %s263 = sphi 0, %s265
      %s266 = sphi 0, %s263
      %s267 = sphi 0, %s266
      %s283 = sphi 0, %s267
    $region4: #{tpu_custom_call.1} parent=1 // loop_header_branch
      %31 = sbr.rel (%p29) target = $region8
    $region5: #{tpu_custom_call.1} parent=1 // loop_body
      %s33 = ssub.s32 %s28, 1
      %s34 = ssub.s32 %s28, 2
      %s41 = sadd.s32 1, %s36
      %p42 = scmp.ge.s32.totalorder %s41, 1
      %s43 = scalar_select %p42, 0, %s41
      %s44 = sadd.s32 1, %s35
      %s45 = scalar_select %p42, %s44, %s35
      %p46 = scmp.ge.s32.totalorder %s45, 2
      %s47 = scalar_select %p46, 0, %s45
      %s48 = ssub.s32 %s35, %s47
      %p49 = scmp.eq.s32.totalorder %s48, 0
      %s51 = sadd.s32 %s50, 1
      %s52 = scalar_select %p49, %s50, %s51
      %p55 = pneg %p49
      %p56 = scmp.eq.s32.totalorder %s28, 1
      %p57 = por %p55, %p56
      %p58 = scmp.ne.s32.totalorder %s50, %s53
      %p59 = scmp.eq.s32.totalorder %s28, 0
      %p60 = por %p58, %p59
      %p61 = scmp.ne.s32.totalorder %s50, %s53
      %p62 = scmp.eq.s32.totalorder %s33, 1
      %p63 = por %p61, %p62
      %p64 = scmp.ne.s32.totalorder %s53, %s54
      %p65 = scmp.eq.s32.totalorder %s33, 0
      %p66 = por %p64, %p65
      %p67 = scmp.ne.s32.totalorder %s53, %s54
      %p68 = scmp.eq.s32.totalorder %s34, 1
      %p69 = por %p67, %p68
      %p71 = scmp.ne.s32.totalorder %s54, %s70
      %p72 = scmp.eq.s32.totalorder %s34, 0
      %p73 = por %p71, %p72
      %s74 = ssub.s32 %s35, %s47
      %s75 = ssub.s32 %s36, %s43
      %s76 = sor.u32 %s74, %s75
      %p77 = scmp.eq.s32.totalorder %s76, 0
      %s79 = sadd.s32 %s78, 1
      %s80 = scalar_select %p77, %s78, %s79
      %p83 = pneg %p77
      %p84 = scmp.eq.s32.totalorder %s28, 1
      %p85 = por %p83, %p84
      %p86 = scmp.ne.s32.totalorder %s78, %s81
      %p87 = scmp.eq.s32.totalorder %s28, 0
      %p88 = por %p86, %p87
      %p89 = scmp.ne.s32.totalorder %s78, %s81
      %p90 = scmp.eq.s32.totalorder %s33, 1
      %p91 = por %p89, %p90
      %p92 = scmp.ne.s32.totalorder %s81, %s82
      %p93 = scmp.eq.s32.totalorder %s33, 0
      %p94 = por %p92, %p93
      %p95 = scmp.ne.s32.totalorder %s81, %s82
      %p96 = scmp.eq.s32.totalorder %s34, 1
      %p97 = por %p95, %p96
      %p99 = scmp.ne.s32.totalorder %s82, %s98
      %p100 = scmp.eq.s32.totalorder %s34, 0
      %p101 = por %p99, %p100
      %s102 = ssub.s32 %s35, %s47
      %p103 = scmp.eq.s32.totalorder %s102, 0
      %s105 = sadd.s32 %s104, 1
      %s106 = scalar_select %p103, %s104, %s105
      %p109 = pneg %p103
      %p110 = scmp.eq.s32.totalorder %s28, 1
      %p111 = por %p109, %p110
      %p112 = scmp.ne.s32.totalorder %s104, %s107
      %p113 = scmp.eq.s32.totalorder %s28, 0
      %p114 = por %p112, %p113
      %p115 = scmp.ne.s32.totalorder %s104, %s107
      %p116 = scmp.eq.s32.totalorder %s33, 1
      %p117 = por %p115, %p116
      %p118 = scmp.ne.s32.totalorder %s107, %s108
      %p119 = scmp.eq.s32.totalorder %s33, 0
      %p120 = por %p118, %p119
      %p121 = scmp.ne.s32.totalorder %s107, %s108
      %p122 = scmp.eq.s32.totalorder %s34, 1
      %p123 = por %p121, %p122
      %p125 = scmp.ne.s32.totalorder %s108, %s124
      %p126 = scmp.eq.s32.totalorder %s34, 0
      %p127 = por %p125, %p126
      %s128 = ssub.s32 %s35, %s47
      %p129 = scmp.eq.s32.totalorder %s128, 0
      %s131 = sadd.s32 %s130, 1
      %s132 = scalar_select %p129, %s130, %s131
      %p135 = pneg %p129
      %p136 = scmp.eq.s32.totalorder %s28, 1
      %p137 = por %p135, %p136
      %p138 = scmp.ne.s32.totalorder %s130, %s133
      %p139 = scmp.eq.s32.totalorder %s28, 0
      %p140 = por %p138, %p139
      %p141 = scmp.ne.s32.totalorder %s130, %s133
      %p142 = scmp.eq.s32.totalorder %s33, 1
      %p143 = por %p141, %p142
      %p144 = scmp.ne.s32.totalorder %s133, %s134
      %p145 = scmp.eq.s32.totalorder %s33, 0
      %p146 = por %p144, %p145
      %p147 = scmp.ne.s32.totalorder %s133, %s134
      %p148 = scmp.eq.s32.totalorder %s34, 1
      %p149 = por %p147, %p148
      %p151 = scmp.ne.s32.totalorder %s134, %s150
      %p152 = scmp.eq.s32.totalorder %s34, 0
      %p153 = por %p151, %p152
      %s155 = sadd.s32 %s154, 1
      %p158 = scmp.eq.s32.totalorder %s28, 1
      %p159 = scmp.ne.s32.totalorder %s154, %s156
      %p160 = scmp.eq.s32.totalorder %s28, 0
      %p161 = por %p159, %p160
      %p162 = scmp.ne.s32.totalorder %s154, %s156
      %p163 = scmp.eq.s32.totalorder %s33, 1
      %p164 = por %p162, %p163
      %p165 = scmp.ne.s32.totalorder %s156, %s157
      %p166 = scmp.eq.s32.totalorder %s33, 0
      %p167 = por %p165, %p166
      %p168 = scmp.ne.s32.totalorder %s156, %s157
      %p169 = scmp.eq.s32.totalorder %s34, 1
      %p170 = por %p168, %p169
      %p172 = scmp.ne.s32.totalorder %s157, %s171
      %p173 = scmp.eq.s32.totalorder %s34, 0
      %p174 = por %p172, %p173
      %s176 = sadd.s32 %s175, 1
      %p179 = scmp.eq.s32.totalorder %s28, 1
      %p180 = scmp.ne.s32.totalorder %s175, %s177
      %p181 = scmp.eq.s32.totalorder %s28, 0
      %p182 = por %p180, %p181
      %p183 = scmp.ne.s32.totalorder %s175, %s177
      %p184 = scmp.eq.s32.totalorder %s33, 1
      %p185 = por %p183, %p184
      %p186 = scmp.ne.s32.totalorder %s177, %s178
      %p187 = scmp.eq.s32.totalorder %s33, 0
      %p188 = por %p186, %p187
      %p189 = scmp.ne.s32.totalorder %s177, %s178
      %p190 = scmp.eq.s32.totalorder %s34, 1
      %p191 = por %p189, %p190
      %p193 = scmp.ne.s32.totalorder %s178, %s192
      %p194 = scmp.eq.s32.totalorder %s34, 0
      %p195 = por %p193, %p194
      %s197 = sadd.s32 %s196, 1
      %p200 = scmp.eq.s32.totalorder %s28, 1
      %p201 = scmp.ne.s32.totalorder %s196, %s198
      %p202 = scmp.eq.s32.totalorder %s28, 0
      %p203 = por %p201, %p202
      %p204 = scmp.ne.s32.totalorder %s196, %s198
      %p205 = scmp.eq.s32.totalorder %s33, 1
      %p206 = por %p204, %p205
      %p207 = scmp.ne.s32.totalorder %s198, %s199
      %p208 = scmp.eq.s32.totalorder %s33, 0
      %p209 = por %p207, %p208
      %p210 = scmp.ne.s32.totalorder %s198, %s199
      %p211 = scmp.eq.s32.totalorder %s34, 1
      %p212 = por %p210, %p211
      %p214 = scmp.ne.s32.totalorder %s199, %s213
      %p215 = scmp.eq.s32.totalorder %s34, 0
      %p216 = por %p214, %p215
      %s218 = sadd.s32 %s217, 1
      %p221 = scmp.eq.s32.totalorder %s28, 1
      %p222 = scmp.ne.s32.totalorder %s217, %s219
      %p223 = scmp.eq.s32.totalorder %s28, 0
      %p224 = por %p222, %p223
      %p225 = scmp.ne.s32.totalorder %s217, %s219
      %p226 = scmp.eq.s32.totalorder %s33, 1
      %p227 = por %p225, %p226
      %p228 = scmp.ne.s32.totalorder %s219, %s220
      %p229 = scmp.eq.s32.totalorder %s33, 0
      %p230 = por %p228, %p229
      %p231 = scmp.ne.s32.totalorder %s219, %s220
      %p232 = scmp.eq.s32.totalorder %s34, 1
      %p233 = por %p231, %p232
      %p235 = scmp.ne.s32.totalorder %s220, %s234
      %p236 = scmp.eq.s32.totalorder %s34, 0
      %p237 = por %p235, %p236
      %s239 = sadd.s32 %s238, 1
      %p242 = scmp.eq.s32.totalorder %s28, 1
      %p243 = scmp.ne.s32.totalorder %s238, %s240
      %p244 = scmp.eq.s32.totalorder %s28, 0
      %p245 = por %p243, %p244
      %p246 = scmp.ne.s32.totalorder %s238, %s240
      %p247 = scmp.eq.s32.totalorder %s33, 1
      %p248 = por %p246, %p247
      %p249 = scmp.ne.s32.totalorder %s240, %s241
      %p250 = scmp.eq.s32.totalorder %s33, 0
      %p251 = por %p249, %p250
      %p252 = scmp.ne.s32.totalorder %s240, %s241
      %p253 = scmp.eq.s32.totalorder %s34, 1
      %p254 = por %p252, %p253
      %p256 = scmp.ne.s32.totalorder %s241, %s255
      %p257 = scmp.eq.s32.totalorder %s34, 0
      %p258 = por %p256, %p257
      %s259 = ssub.s32 %s35, %s47
      %s260 = ssub.s32 %s36, %s43
      %s261 = sor.u32 %s259, %s260
      %p262 = scmp.eq.s32.totalorder %s261, 0
      %s264 = sadd.s32 %s263, 1
      %s265 = scalar_select %p262, %s263, %s264
      %p268 = pneg %p262
      %p269 = scmp.eq.s32.totalorder %s28, 1
      %p270 = por %p268, %p269
      %p271 = scmp.ne.s32.totalorder %s263, %s266
      %p272 = scmp.eq.s32.totalorder %s28, 0
      %p273 = por %p271, %p272
      %p274 = scmp.ne.s32.totalorder %s263, %s266
      %p275 = scmp.eq.s32.totalorder %s33, 1
      %p276 = por %p274, %p275
      %p277 = scmp.ne.s32.totalorder %s266, %s267
      %p278 = scmp.eq.s32.totalorder %s33, 0
      %p279 = por %p277, %p278
      %p280 = scmp.ne.s32.totalorder %s266, %s267
      %p281 = scmp.eq.s32.totalorder %s34, 1
      %p282 = por %p280, %p281
      %p284 = scmp.ne.s32.totalorder %s267, %s283
      %p285 = scmp.eq.s32.totalorder %s34, 0
      %p286 = por %p284, %p285
      %p287 = scmp.le.s32.totalorder 1, %s28
      %p288 = scmp.lt.s32.totalorder %s28, 3
      %p289 = pnand %p287, %p288
      %p290 = pneg %p289
      // Predicated region
      $region9: #{tpu_custom_call.1} parent=5 // pred_check
        _
      $region10: #{tpu_custom_call.1} parent=5 // pred_check_branch
        %292 = sbr.rel (%p289) target = $region12
      $region11: #{tpu_custom_call.1} parent=5 // pred_region
        %s293 = ssub.s32 %s28, 1
        // Predicated region
        $region13: #{tpu_custom_call.1} parent=11 // pred_check
          %p294 = pneg %p167
        $region14: #{tpu_custom_call.1} parent=11 // pred_check_branch
          %296 = sbr.rel (%p294) target = $region16
        $region15: #{tpu_custom_call.1} parent=11 // pred_region
          %s298 = ssub.s32 256, 256
          %299 = vsyncadd [#allocation10], %s298
          %s300 = sshll.u32 [#allocation11], 4
          %s301 = int_to_ptr.vmem [resolvable:$true] %s300
          %306 = dma.hbm_to_vmem [thread:$0]  %s4, 256, %s301, [#allocation10], 64, 64, 4
        $region16: #{tpu_custom_call.1} parent=11 // pred_fallthru
          _
        // Predicated region
        $region17: #{tpu_custom_call.1} parent=11 // pred_check
          %p307 = pneg %p188
        $region18: #{tpu_custom_call.1} parent=11 // pred_check_branch
          %309 = sbr.rel (%p307) target = $region20
        $region19: #{tpu_custom_call.1} parent=11 // pred_region
          _
        $region20: #{tpu_custom_call.1} parent=11 // pred_fallthru
          _
        // Predicated region
        $region21: #{tpu_custom_call.1} parent=11 // pred_check
          %p310 = pneg %p209
        $region22: #{tpu_custom_call.1} parent=11 // pred_check_branch
          %312 = sbr.rel (%p310) target = $region24
        $region23: #{tpu_custom_call.1} parent=11 // pred_region
          %s314 = ssub.s32 256, 256
          %315 = vsyncadd [#allocation13], %s314
          %s316 = sshll.u32 [#allocation12], 4
          %s317 = int_to_ptr.vmem [resolvable:$true] %s316
          %322 = dma.hbm_to_vmem [thread:$0]  %s6, 256, %s317, [#allocation13], 64, 64, 4
        $region24: #{tpu_custom_call.1} parent=11 // pred_fallthru
          _
        // Predicated region
        $region25: #{tpu_custom_call.1} parent=11 // pred_check
          %p323 = pneg %p230
        $region26: #{tpu_custom_call.1} parent=11 // pred_check_branch
          %325 = sbr.rel (%p323) target = $region28
        $region27: #{tpu_custom_call.1} parent=11 // pred_region
          %s327 = ssub.s32 256, 256
          %328 = vsyncadd [#allocation13], %s327
          %s329 = sshll.u32 [#allocation14], 4
          %s330 = int_to_ptr.vmem [resolvable:$true] %s329
          %335 = dma.hbm_to_vmem [thread:$0]  %s7, 256, %s330, [#allocation13], 64, 64, 4
        $region28: #{tpu_custom_call.1} parent=11 // pred_fallthru
          _
        // Predicated region
        $region29: #{tpu_custom_call.1} parent=11 // pred_check
          %p336 = pneg %p251
        $region30: #{tpu_custom_call.1} parent=11 // pred_check_branch
          %338 = sbr.rel (%p336) target = $region32
        $region31: #{tpu_custom_call.1} parent=11 // pred_region
          _
        $region32: #{tpu_custom_call.1} parent=11 // pred_fallthru
          _
      $region12: #{tpu_custom_call.1} parent=5 // pred_fallthru
        _
      %p339 = scmp.lt.s32.totalorder %s28, 2
      // Predicated region
      $region33: #{tpu_custom_call.1} parent=5 // pred_check
        %p340 = pneg %p339
      $region34: #{tpu_custom_call.1} parent=5 // pred_check_branch
        %342 = sbr.rel (%p340) target = $region36
      $region35: #{tpu_custom_call.1} parent=5 // pred_region
        // Predicated region
        $region37: #{tpu_custom_call.1} parent=35 // pred_check
          %p343 = pneg %p60
        $region38: #{tpu_custom_call.1} parent=35 // pred_check_branch
          %345 = sbr.rel (%p343) target = $region40
        $region39: #{tpu_custom_call.1} parent=35 // pred_region
          %s346 = sand.u32 %s50, 1
          %s347 = scalar_lea.sflag [#allocation4], %s346
          %s348 = sand.u32 %s50, 1
          %s349 = scalar_lea.vmem [#allocation3], %s348
          %s351 = ssub.s32 16, 16
          %352 = vsyncadd %s347, %s351
          %s353 = smul.addr %s35, 16
          %s354 = scalar_lea.hbm %s0, %s353
          %s356 = sshll.u32 %s349, 4
          %s357 = int_to_ptr.vmem [resolvable:$true] %s356
          %359 = dma.hbm_to_vmem [thread:$0]  %s354, 16, %s357, %s347
        $region40: #{tpu_custom_call.1} parent=35 // pred_fallthru
          _
        // Predicated region
        $region41: #{tpu_custom_call.1} parent=35 // pred_check
          %p360 = pneg %p88
        $region42: #{tpu_custom_call.1} parent=35 // pred_check_branch
          %362 = sbr.rel (%p360) target = $region44
        $region43: #{tpu_custom_call.1} parent=35 // pred_region
          %s363 = sand.u32 %s28, 1
          %s364 = scalar_lea.sflag [#allocation7], %s363
          %s365 = sand.u32 %s78, 1
          %s366 = smul.addr %s365, 4
          %s367 = scalar_lea.vmem [#allocation6], %s366
          %s369 = ssub.s32 64, 64
          %370 = vsyncadd %s364, %s369
          %s371 = sadd.s32 %s36, %s35
          %s372 = smul.addr %s371, 64
          %s373 = scalar_lea.hbm %s1, %s372
          %s375 = sshll.u32 %s367, 4
          %s376 = int_to_ptr.vmem [resolvable:$true] %s375
          %378 = dma.hbm_to_vmem [thread:$0]  %s373, 64, %s376, %s364
        $region44: #{tpu_custom_call.1} parent=35 // pred_fallthru
          _
        // Predicated region
        $region45: #{tpu_custom_call.1} parent=35 // pred_check
          %p379 = pneg %p114
        $region46: #{tpu_custom_call.1} parent=35 // pred_check_branch
          %381 = sbr.rel (%p379) target = $region48
        $region47: #{tpu_custom_call.1} parent=35 // pred_region
          %s382 = sand.u32 %s28, 1
          %s383 = scalar_lea.sflag [#allocation7], %s382
          %s384 = sand.u32 %s104, 1
          %s385 = smul.addr %s384, 4
          %s386 = scalar_lea.vmem [#allocation8], %s385
          %s388 = ssub.s32 64, 64
          %389 = vsyncadd %s383, %s388
          %s390 = smul.addr %s35, 64
          %s391 = scalar_lea.hbm %s2, %s390
          %s393 = sshll.u32 %s386, 4
          %s394 = int_to_ptr.vmem [resolvable:$true] %s393
          %396 = dma.hbm_to_vmem [thread:$0]  %s391, 64, %s394, %s383
        $region48: #{tpu_custom_call.1} parent=35 // pred_fallthru
          _
        // Predicated region
        $region49: #{tpu_custom_call.1} parent=35 // pred_check
          %p397 = pneg %p140
        $region50: #{tpu_custom_call.1} parent=35 // pred_check_branch
          %399 = sbr.rel (%p397) target = $region52
        $region51: #{tpu_custom_call.1} parent=35 // pred_region
          %s400 = sand.u32 %s28, 1
          %s401 = scalar_lea.sflag [#allocation10], %s400
          %s402 = sand.u32 %s130, 1
          %s403 = smul.addr %s402, 4
          %s404 = scalar_lea.vmem [#allocation9], %s403
          %s406 = ssub.s32 64, 64
          %407 = vsyncadd %s401, %s406
          %s408 = smul.addr %s35, 64
          %s409 = scalar_lea.hbm %s3, %s408
          %s411 = sshll.u32 %s404, 4
          %s412 = int_to_ptr.vmem [resolvable:$true] %s411
          %414 = dma.hbm_to_vmem [thread:$0]  %s409, 64, %s412, %s401
        $region52: #{tpu_custom_call.1} parent=35 // pred_fallthru
          _
      $region36: #{tpu_custom_call.1} parent=5 // pred_fallthru
        _
      %p415 = scmp.le.s32.totalorder 1, %s28
      %p416 = scmp.lt.s32.totalorder %s28, 3
      %p417 = pnand %p415, %p416
      %p418 = pneg %p417
      // Predicated region
      $region53: #{tpu_custom_call.1} parent=5 // pred_check
        _
      $region54: #{tpu_custom_call.1} parent=5 // pred_check_branch
        %420 = sbr.rel (%p417) target = $region56
      $region55: #{tpu_custom_call.1} parent=5 // pred_region
        %s421 = ssub.s32 %s28, 1
        %s422 = sand.u32 %s53, 1
        %s423 = scalar_lea.sflag [#allocation4], %s422
        %s424 = sand.u32 %s53, 1
        %s425 = scalar_lea.vmem [#allocation3], %s424
        // Predicated region
        $region57: #{tpu_custom_call.1} parent=55 // pred_check
          %p426 = pneg %p66
        $region58: #{tpu_custom_call.1} parent=55 // pred_check_branch
          %428 = sbr.rel (%p426) target = $region60
        $region59: #{tpu_custom_call.1} parent=55 // pred_region
          %429 = dma.done %s423, 16
        $region60: #{tpu_custom_call.1} parent=55 // pred_fallthru
          _
        %s430 = sand.u32 %s33, 1
        %s431 = scalar_lea.sflag [#allocation7], %s430
        %s432 = sand.u32 %s81, 1
        %s433 = smul.addr %s432, 4
        %s434 = scalar_lea.vmem [#allocation6], %s433
        // Predicated region
        $region61: #{tpu_custom_call.1} parent=55 // pred_check
          %p435 = pneg %p94
        $region62: #{tpu_custom_call.1} parent=55 // pred_check_branch
          %437 = sbr.rel (%p435) target = $region64
        $region63: #{tpu_custom_call.1} parent=55 // pred_region
          %438 = dma.done %s431, 64
        $region64: #{tpu_custom_call.1} parent=55 // pred_fallthru
          _
        %s439 = sand.u32 %s33, 1
        %s440 = scalar_lea.sflag [#allocation7], %s439
        %s441 = sand.u32 %s107, 1
        %s442 = smul.addr %s441, 4
        %s443 = scalar_lea.vmem [#allocation8], %s442
        // Predicated region
        $region65: #{tpu_custom_call.1} parent=55 // pred_check
          %p444 = pneg %p120
        $region66: #{tpu_custom_call.1} parent=55 // pred_check_branch
          %446 = sbr.rel (%p444) target = $region68
        $region67: #{tpu_custom_call.1} parent=55 // pred_region
          %447 = dma.done %s440, 64
        $region68: #{tpu_custom_call.1} parent=55 // pred_fallthru
          _
        %s448 = sand.u32 %s33, 1
        %s449 = scalar_lea.sflag [#allocation10], %s448
        %s450 = sand.u32 %s133, 1
        %s451 = smul.addr %s450, 4
        %s452 = scalar_lea.vmem [#allocation9], %s451
        // Predicated region
        $region69: #{tpu_custom_call.1} parent=55 // pred_check
          %p453 = pneg %p146
        $region70: #{tpu_custom_call.1} parent=55 // pred_check_branch
          %455 = sbr.rel (%p453) target = $region72
        $region71: #{tpu_custom_call.1} parent=55 // pred_region
          %456 = dma.done %s449, 64
        $region72: #{tpu_custom_call.1} parent=55 // pred_fallthru
          _
        // Predicated region
        $region73: #{tpu_custom_call.1} parent=55 // pred_check
          %p457 = pneg %p167
        $region74: #{tpu_custom_call.1} parent=55 // pred_check_branch
          %459 = sbr.rel (%p457) target = $region76
        $region75: #{tpu_custom_call.1} parent=55 // pred_region
          %460 = dma.done [#allocation10], 256
        $region76: #{tpu_custom_call.1} parent=55 // pred_fallthru
          _
        // Predicated region
        $region77: #{tpu_custom_call.1} parent=55 // pred_check
          %p461 = pneg %p209
        $region78: #{tpu_custom_call.1} parent=55 // pred_check_branch
          %463 = sbr.rel (%p461) target = $region80
        $region79: #{tpu_custom_call.1} parent=55 // pred_region
          %464 = dma.done [#allocation13], 256
        $region80: #{tpu_custom_call.1} parent=55 // pred_fallthru
          _
        // Predicated region
        $region81: #{tpu_custom_call.1} parent=55 // pred_check
          %p465 = pneg %p230
        $region82: #{tpu_custom_call.1} parent=55 // pred_check_branch
          %467 = sbr.rel (%p465) target = $region84
        $region83: #{tpu_custom_call.1} parent=55 // pred_region
          %468 = dma.done [#allocation13], 256
        $region84: #{tpu_custom_call.1} parent=55 // pred_fallthru
          _
        %s469 = sand.u32 %s53, 1
        %s470 = scalar_lea.sflag [#allocation4], %s469
        %s471 = sand.u32 %s53, 1
        %s472 = scalar_lea.vmem [#allocation3], %s471
        %p473 = pneg %p66
        %p474 = pneg %p63
        %s475 = sand.u32 %s33, 1
        %s476 = scalar_lea.sflag [#allocation7], %s475
        %s477 = sand.u32 %s81, 1
        %s478 = smul.addr %s477, 4
        %s479 = scalar_lea.vmem [#allocation6], %s478
        %p480 = pneg %p94
        %p481 = pneg %p91
        %s482 = sand.u32 %s33, 1
        %s483 = scalar_lea.sflag [#allocation7], %s482
        %s484 = sand.u32 %s107, 1
        %s485 = smul.addr %s484, 4
        %s486 = scalar_lea.vmem [#allocation8], %s485
        %p487 = pneg %p120
        %p488 = pneg %p117
        %s489 = sand.u32 %s33, 1
        %s490 = scalar_lea.sflag [#allocation10], %s489
        %s491 = sand.u32 %s133, 1
        %s492 = smul.addr %s491, 4
        %s493 = scalar_lea.vmem [#allocation9], %s492
        %p494 = pneg %p146
        %p495 = pneg %p143
        %p496 = pneg %p167
        %p497 = pneg %p164
        %p498 = pneg %p188
        %p499 = pneg %p185
        %p500 = pneg %p209
        %p501 = pneg %p206
        %p502 = pneg %p230
        %p503 = pneg %p227
        %p504 = pneg %p251
        %p505 = pneg %p248
        %p506 = pneg %p279
        %p507 = pneg %p276
        %s508 = sand.u32 %s266, 1
        %s509 = scalar_lea.sflag [#allocation5], %s508
        %s510 = sand.u32 %s266, 1
        %s511 = smul.addr %s510, 8
        %s512 = scalar_lea.vmem [#allocation15], %s511
        %v514 = vld [vmem:[%s434] sm:$0xf]
        %v515 = vld [vmem:[#allocation11] sm:$0xf]
        %v516 = vld [vmem:[#allocation11 + $0x4] sm:$0xf]
        %v517 = vld [vmem:[#allocation11 + $0x8] sm:$0xf]
        %v518 = vld [vmem:[#allocation11 + $0xc] sm:$0xf]
        %v523 = vunpack.c.l.b16 %v515
        %v524 = vunpack.c.l.b16 %v516
        %v525 = vunpack.c.l.b16 %v517
        %v526 = vunpack.c.l.b16 %v518
        %v527 = vpack.c.b16 %v524, %v523
        %v528 = vpack.c.b16 %v526, %v525
        %vm531 = vcmask 261120
        %v533 = vsel %vm531, %v514, 0
        %535 = vmatprep.subr.bf16.mxu0 0
        %536 = vmatpush1.bf16.msra.mxu0 %v527
        %537 = vmatprep.subr.bf16.mxu0 0
        %538 = vmatpush1.bf16.msra.mxu0 %v528
        %539 = vmatprep.subr.bf16.mxu0 0
        %540 = vmatpush1.bf16.msra.mxu0 0
        %541 = vmatprep.subr.bf16.mxu0 0
        %542 = vmatpush1.bf16.msra.mxu0 0
        %543 = vmatprep.subr.bf16.mxu0 0
        %544 = vmatpush1.bf16.msra.mxu0 0
        %545 = vmatprep.subr.bf16.mxu0 0
        %546 = vmatpush1.bf16.msra.mxu0 0
        %547 = vmatprep.subr.bf16.mxu0 0
        %548 = vmatpush1.bf16.msra.mxu0 0
        %549 = vmatprep.subr.bf16.mxu0 0
        %550 = vmatpush1.bf16.msra.mxu0 0
        %551 = vmatprep.subr.bf16.mxu0 0
        %552 = vmatpush1.bf16.msra.mxu0 0
        %553 = vmatprep.subr.bf16.mxu0 0
        %554 = vmatpush1.bf16.msra.mxu0 0
        %555 = vmatprep.subr.bf16.mxu0 0
        %556 = vmatpush1.bf16.msra.mxu0 0
        %557 = vmatprep.subr.bf16.mxu0 0
        %558 = vmatpush1.bf16.msra.mxu0 0
        %559 = vmatprep.subr.bf16.mxu0 0
        %560 = vmatpush1.bf16.msra.mxu0 0
        %561 = vmatprep.subr.bf16.mxu0 0
        %562 = vmatpush1.bf16.msra.mxu0 0
        %563 = vmatprep.subr.bf16.mxu0 0
        %564 = vmatpush1.bf16.msra.mxu0 0
        %565 = vmatprep.subr.bf16.mxu0 0
        %566 = vmatpush1.bf16.msra.mxu0 0
        %567 = vmatprep.mubr.bf16.mxu0 0
        %568 = vmatmul.mubr.bf16.gmra.mrb[0].mxu0 %v533
        %v569 = vpop.f32.mrb[0].mxu0
        %v570 = vadd.f32 0.0, %v569
        %v571 = vpop.f32.mrb[0].mxu0
        %v572 = vpop.f32.mrb[0].mxu0
        %v573 = vpop.f32.mrb[0].mxu0
        %574 = vdwg.mxu0
        %v575 = vpack.c.bf16 %v570, %v570
        %v576 = vld [vmem:[%s443] sm:$0xf]
        %v577 = vld [vmem:[%s5] sm:$0xf]
        %v578 = vld [vmem:[%s5 + $0x4] sm:$0xf]
        %v579 = vld [vmem:[%s5 + $0x8] sm:$0xf]
        %v580 = vld [vmem:[%s5 + $0xc] sm:$0xf]
        %v585 = vunpack.c.l.b16 %v577
        %v586 = vunpack.c.l.b16 %v578
        %v587 = vunpack.c.l.b16 %v579
        %v588 = vunpack.c.l.b16 %v580
        %v589 = vpack.c.b16 %v586, %v585
        %v590 = vpack.c.b16 %v588, %v587
        %v594 = vsel %vm531, %v576, 0
        %596 = vmatprep.subr.bf16.mxu0 0
        %597 = vmatpush1.bf16.msra.mxu0 %v589
        %598 = vmatprep.subr.bf16.mxu0 0
        %599 = vmatpush1.bf16.msra.mxu0 %v590
        %600 = vmatprep.subr.bf16.mxu0 0
        %601 = vmatpush1.bf16.msra.mxu0 0
        %602 = vmatprep.subr.bf16.mxu0 0
        %603 = vmatpush1.bf16.msra.mxu0 0
        %604 = vmatprep.subr.bf16.mxu0 0
        %605 = vmatpush1.bf16.msra.mxu0 0
        %606 = vmatprep.subr.bf16.mxu0 0
        %607 = vmatpush1.bf16.msra.mxu0 0
        %608 = vmatprep.subr.bf16.mxu0 0
        %609 = vmatpush1.bf16.msra.mxu0 0
        %610 = vmatprep.subr.bf16.mxu0 0
        %611 = vmatpush1.bf16.msra.mxu0 0
        %612 = vmatprep.subr.bf16.mxu0 0
        %613 = vmatpush1.bf16.msra.mxu0 0
        %614 = vmatprep.subr.bf16.mxu0 0
        %615 = vmatpush1.bf16.msra.mxu0 0
        %616 = vmatprep.subr.bf16.mxu0 0
        %617 = vmatpush1.bf16.msra.mxu0 0
        %618 = vmatprep.subr.bf16.mxu0 0
        %619 = vmatpush1.bf16.msra.mxu0 0
        %620 = vmatprep.subr.bf16.mxu0 0
        %621 = vmatpush1.bf16.msra.mxu0 0
        %622 = vmatprep.subr.bf16.mxu0 0
        %623 = vmatpush1.bf16.msra.mxu0 0
        %624 = vmatprep.subr.bf16.mxu0 0
        %625 = vmatpush1.bf16.msra.mxu0 0
        %626 = vmatprep.subr.bf16.mxu0 0
        %627 = vmatpush1.bf16.msra.mxu0 0
        %628 = vmatprep.mubr.bf16.mxu0 0
        %629 = vmatmul.mubr.bf16.gmra.mrb[0].mxu0 %v594
        %v630 = vpop.f32.mrb[0].mxu0
        %v631 = vadd.f32 0.0, %v630
        %v632 = vpop.f32.mrb[0].mxu0
        %v633 = vpop.f32.mrb[0].mxu0
        %v634 = vpop.f32.mrb[0].mxu0
        %635 = vdwg.mxu0
        %v636 = vpack.c.bf16 %v631, %v631
        %v637 = vld [vmem:[%s452] sm:$0xf]
        %v638 = vld [vmem:[#allocation12] sm:$0xf]
        %v639 = vld [vmem:[#allocation12 + $0x4] sm:$0xf]
        %v640 = vld [vmem:[#allocation12 + $0x8] sm:$0xf]
        %v641 = vld [vmem:[#allocation12 + $0xc] sm:$0xf]
        %v646 = vunpack.c.l.b16 %v638
        %v647 = vunpack.c.l.b16 %v639
        %v648 = vunpack.c.l.b16 %v640
        %v649 = vunpack.c.l.b16 %v641
        %v650 = vpack.c.b16 %v647, %v646
        %v651 = vpack.c.b16 %v649, %v648
        %v655 = vsel %vm531, %v637, 0
        %657 = vmatprep.subr.bf16.mxu0 0
        %658 = vmatpush1.bf16.msra.mxu0 %v650
        %659 = vmatprep.subr.bf16.mxu0 0
        %660 = vmatpush1.bf16.msra.mxu0 %v651
        %661 = vmatprep.subr.bf16.mxu0 0
        %662 = vmatpush1.bf16.msra.mxu0 0
        %663 = vmatprep.subr.bf16.mxu0 0
        %664 = vmatpush1.bf16.msra.mxu0 0
        %665 = vmatprep.subr.bf16.mxu0 0
        %666 = vmatpush1.bf16.msra.mxu0 0
        %667 = vmatprep.subr.bf16.mxu0 0
        %668 = vmatpush1.bf16.msra.mxu0 0
        %669 = vmatprep.subr.bf16.mxu0 0
        %670 = vmatpush1.bf16.msra.mxu0 0
        %671 = vmatprep.subr.bf16.mxu0 0
        %672 = vmatpush1.bf16.msra.mxu0 0
        %673 = vmatprep.subr.bf16.mxu0 0
        %674 = vmatpush1.bf16.msra.mxu0 0
        %675 = vmatprep.subr.bf16.mxu0 0
        %676 = vmatpush1.bf16.msra.mxu0 0
        %677 = vmatprep.subr.bf16.mxu0 0
        %678 = vmatpush1.bf16.msra.mxu0 0
        %679 = vmatprep.subr.bf16.mxu0 0
        %680 = vmatpush1.bf16.msra.mxu0 0
        %681 = vmatprep.subr.bf16.mxu0 0
        %682 = vmatpush1.bf16.msra.mxu0 0
        %683 = vmatprep.subr.bf16.mxu0 0
        %684 = vmatpush1.bf16.msra.mxu0 0
        %685 = vmatprep.subr.bf16.mxu0 0
        %686 = vmatpush1.bf16.msra.mxu0 0
        %687 = vmatprep.subr.bf16.mxu0 0
        %688 = vmatpush1.bf16.msra.mxu0 0
        %689 = vmatprep.mubr.bf16.mxu0 0
        %690 = vmatmul.mubr.bf16.gmra.mrb[0].mxu0 %v655
        %v691 = vpop.f32.mrb[0].mxu0
        %v692 = vadd.f32 0.0, %v691
        %v693 = vpop.f32.mrb[0].mxu0
        %v694 = vpop.f32.mrb[0].mxu0
        %v695 = vpop.f32.mrb[0].mxu0
        %696 = vdwg.mxu0
        %v697 = vpack.c.bf16 %v692, %v692
        %v698 = vld [vmem:[%s425] sm:$0x1]
        %v700 = vlaneseq
        %v701 = vshrl.u32 %v700, 7
        %v702 = vsub.s32 0, %v701
        %v703 = vrot.slane %v698, %v702
        %vm705 = vcmask 64512
        %v707 = vsel %vm705, %v575, 0
        %v710 = vsel %vm705, %v636, 0
        %712 = vmatprep.subr.bf16.mxu0 0
        %713 = vmatpush1.bf16.xpose.msra.mxu0 %v710
        %714 = vmatprep.subr.bf16.mxu0 0
        %715 = vmatpush1.bf16.xpose.msra.mxu0 0
        %716 = vmatprep.subr.bf16.mxu0 0
        %717 = vmatpush1.bf16.xpose.msra.mxu0 0
        %718 = vmatprep.subr.bf16.mxu0 0
        %719 = vmatpush1.bf16.xpose.msra.mxu0 0
        %720 = vmatprep.subr.bf16.mxu0 0
        %721 = vmatpush1.bf16.xpose.msra.mxu0 0
        %722 = vmatprep.subr.bf16.mxu0 0
        %723 = vmatpush1.bf16.xpose.msra.mxu0 0
        %724 = vmatprep.subr.bf16.mxu0 0
        %725 = vmatpush1.bf16.xpose.msra.mxu0 0
        %726 = vmatprep.subr.bf16.mxu0 0
        %727 = vmatpush1.bf16.xpose.msra.mxu0 0
        %728 = vmatprep.subr.bf16.mxu0 0
        %729 = vmatpush1.bf16.xpose.msra.mxu0 0
        %730 = vmatprep.subr.bf16.mxu0 0
        %731 = vmatpush1.bf16.xpose.msra.mxu0 0
        %732 = vmatprep.subr.bf16.mxu0 0
        %733 = vmatpush1.bf16.xpose.msra.mxu0 0
        %734 = vmatprep.subr.bf16.mxu0 0
        %735 = vmatpush1.bf16.xpose.msra.mxu0 0
        %736 = vmatprep.subr.bf16.mxu0 0
        %737 = vmatpush1.bf16.xpose.msra.mxu0 0
        %738 = vmatprep.subr.bf16.mxu0 0
        %739 = vmatpush1.bf16.xpose.msra.mxu0 0
        %740 = vmatprep.subr.bf16.mxu0 0
        %741 = vmatpush1.bf16.xpose.msra.mxu0 0
        %742 = vmatprep.subr.bf16.mxu0 0
        %743 = vmatpush1.bf16.xpose.msra.mxu0 0
        %744 = vmatprep.mubr.bf16.mxu0 0
        %745 = vmatmul.mubr.bf16.gmra.mrb[0].mxu0 %v707
        %v746 = vpop.f32.mrb[0].mxu0
        %v747 = vadd.f32 %v703, %v746
        %v748 = vpop.f32.mrb[0].mxu0
        %v749 = vpop.f32.mrb[0].mxu0
        %v750 = vpop.f32.mrb[0].mxu0
        %751 = vdwg.mxu0
        %v752 = vsel %vm705, %v747, -inf
        %753 = vmax.xlane.f32.xlu0 %v752
        %v754 = vpop.xlane.xlu0 %753
        %v755 = vsub.f32 %v747, %v754
        %v756 = vmul.f32 %v755, 1.442695
        %v757 = vpow.pop %v756
        %v758 = vsel %vm705, %v757, 0.0
        %759 = vadd.xlane.f32.xlu0 %v758
        %v760 = vpop.xlane.xlu0 %759
        %v761 = vpack.c.bf16 %v757, %v757
        %v763 = vsel %vm705, %v761, 0
        %vm765 = vcmask 1043456
        %v767 = vsel %vm765, %v697, 0
        %769 = vmatprep.subr.bf16.mxu0 0
        %770 = vmatpush1.bf16.msra.mxu0 %v767
        %771 = vmatprep.subr.bf16.mxu0 0
        %772 = vmatpush1.bf16.msra.mxu0 0
        %773 = vmatprep.subr.bf16.mxu0 0
        %774 = vmatpush1.bf16.msra.mxu0 0
        %775 = vmatprep.subr.bf16.mxu0 0
        %776 = vmatpush1.bf16.msra.mxu0 0
        %777 = vmatprep.subr.bf16.mxu0 0
        %778 = vmatpush1.bf16.msra.mxu0 0
        %779 = vmatprep.subr.bf16.mxu0 0
        %780 = vmatpush1.bf16.msra.mxu0 0
        %781 = vmatprep.subr.bf16.mxu0 0
        %782 = vmatpush1.bf16.msra.mxu0 0
        %783 = vmatprep.subr.bf16.mxu0 0
        %784 = vmatpush1.bf16.msra.mxu0 0
        %785 = vmatprep.subr.bf16.mxu0 0
        %786 = vmatpush1.bf16.msra.mxu0 0
        %787 = vmatprep.subr.bf16.mxu0 0
        %788 = vmatpush1.bf16.msra.mxu0 0
        %789 = vmatprep.subr.bf16.mxu0 0
        %790 = vmatpush1.bf16.msra.mxu0 0
        %791 = vmatprep.subr.bf16.mxu0 0
        %792 = vmatpush1.bf16.msra.mxu0 0
        %793 = vmatprep.subr.bf16.mxu0 0
        %794 = vmatpush1.bf16.msra.mxu0 0
        %795 = vmatprep.subr.bf16.mxu0 0
        %796 = vmatpush1.bf16.msra.mxu0 0
        %797 = vmatprep.subr.bf16.mxu0 0
        %798 = vmatpush1.bf16.msra.mxu0 0
        %799 = vmatprep.subr.bf16.mxu0 0
        %800 = vmatpush1.bf16.msra.mxu0 0
        %801 = vmatprep.mubr.bf16.mxu0 0
        %802 = vmatmul.mubr.bf16.gmra.mrb[0].mxu0 %v763
        %v803 = vpop.f32.mrb[0].mxu0
        %v804 = vadd.f32 0.0, %v803
        %v805 = vpop.f32.mrb[0].mxu0
        %v806 = vpop.f32.mrb[0].mxu0
        %v807 = vpop.f32.mrb[0].mxu0
        %808 = vdwg.mxu0
        %v809 = vrcp.pop %v760
        %v810 = vmul.f32 %v804, %v809
        %v811 = vpack.c.bf16 %v810, %v810
        %v812 = vld [vmem:[#allocation14] sm:$0xf]
        %v814 = vsel %vm705, %v811, 0
        %v817 = vsel %vm765, %v812, 0
        %819 = vmatprep.subr.bf16.mxu0 0
        %820 = vmatpush1.bf16.msra.mxu0 %v817
        %821 = vmatprep.subr.bf16.mxu0 0
        %822 = vmatpush1.bf16.msra.mxu0 0
        %823 = vmatprep.subr.bf16.mxu0 0
        %824 = vmatpush1.bf16.msra.mxu0 0
        %825 = vmatprep.subr.bf16.mxu0 0
        %826 = vmatpush1.bf16.msra.mxu0 0
        %827 = vmatprep.subr.bf16.mxu0 0
        %828 = vmatpush1.bf16.msra.mxu0 0
        %829 = vmatprep.subr.bf16.mxu0 0
        %830 = vmatpush1.bf16.msra.mxu0 0
        %831 = vmatprep.subr.bf16.mxu0 0
        %832 = vmatpush1.bf16.msra.mxu0 0
        %833 = vmatprep.subr.bf16.mxu0 0
        %834 = vmatpush1.bf16.msra.mxu0 0
        %835 = vmatprep.subr.bf16.mxu0 0
        %836 = vmatpush1.bf16.msra.mxu0 0
        %837 = vmatprep.subr.bf16.mxu0 0
        %838 = vmatpush1.bf16.msra.mxu0 0
        %839 = vmatprep.subr.bf16.mxu0 0
        %840 = vmatpush1.bf16.msra.mxu0 0
        %841 = vmatprep.subr.bf16.mxu0 0
        %842 = vmatpush1.bf16.msra.mxu0 0
        %843 = vmatprep.subr.bf16.mxu0 0
        %844 = vmatpush1.bf16.msra.mxu0 0
        %845 = vmatprep.subr.bf16.mxu0 0
        %846 = vmatpush1.bf16.msra.mxu0 0
        %847 = vmatprep.subr.bf16.mxu0 0
        %848 = vmatpush1.bf16.msra.mxu0 0
        %849 = vmatprep.subr.bf16.mxu0 0
        %850 = vmatpush1.bf16.msra.mxu0 0
        %851 = vmatprep.mubr.bf16.mxu0 0
        %852 = vmatmul.mubr.bf16.gmra.mrb[0].mxu0 %v814
        %v853 = vpop.f32.mrb[0].mxu0
        %v854 = vadd.f32 0.0, %v853
        %v855 = vpop.f32.mrb[0].mxu0
        %v856 = vpop.f32.mrb[0].mxu0
        %v857 = vpop.f32.mrb[0].mxu0
        %858 = vdwg.mxu0
        %859 = vst.msk [vmem:[#allocation2] sm:$0xff] %vm531, %v854
        %861 = vrot.lane.b32.xlu0 %v575, 120
        %v862 = vpop.permute.xlu0 %861
        %864 = vrot.lane.b32.xlu0 %v636, 120
        %v865 = vpop.permute.xlu0 %864
        %v867 = vsel %vm705, %v862, 0
        %v870 = vsel %vm705, %v865, 0
        %872 = vmatprep.subr.bf16.mxu0 0
        %873 = vmatpush1.bf16.xpose.msra.mxu0 %v870
        %874 = vmatprep.subr.bf16.mxu0 0
        %875 = vmatpush1.bf16.xpose.msra.mxu0 0
        %876 = vmatprep.subr.bf16.mxu0 0
        %877 = vmatpush1.bf16.xpose.msra.mxu0 0
        %878 = vmatprep.subr.bf16.mxu0 0
        %879 = vmatpush1.bf16.xpose.msra.mxu0 0
        %880 = vmatprep.subr.bf16.mxu0 0
        %881 = vmatpush1.bf16.xpose.msra.mxu0 0
        %882 = vmatprep.subr.bf16.mxu0 0
        %883 = vmatpush1.bf16.xpose.msra.mxu0 0
        %884 = vmatprep.subr.bf16.mxu0 0
        %885 = vmatpush1.bf16.xpose.msra.mxu0 0
        %886 = vmatprep.subr.bf16.mxu0 0
        %887 = vmatpush1.bf16.xpose.msra.mxu0 0
        %888 = vmatprep.subr.bf16.mxu0 0
        %889 = vmatpush1.bf16.xpose.msra.mxu0 0
        %890 = vmatprep.subr.bf16.mxu0 0
        %891 = vmatpush1.bf16.xpose.msra.mxu0 0
        %892 = vmatprep.subr.bf16.mxu0 0
        %893 = vmatpush1.bf16.xpose.msra.mxu0 0
        %894 = vmatprep.subr.bf16.mxu0 0
        %895 = vmatpush1.bf16.xpose.msra.mxu0 0
        %896 = vmatprep.subr.bf16.mxu0 0
        %897 = vmatpush1.bf16.xpose.msra.mxu0 0
        %898 = vmatprep.subr.bf16.mxu0 0
        %899 = vmatpush1.bf16.xpose.msra.mxu0 0
        %900 = vmatprep.subr.bf16.mxu0 0
        %901 = vmatpush1.bf16.xpose.msra.mxu0 0
        %902 = vmatprep.subr.bf16.mxu0 0
        %903 = vmatpush1.bf16.xpose.msra.mxu0 0
        %904 = vmatprep.mubr.bf16.mxu0 0
        %905 = vmatmul.mubr.bf16.gmra.mrb[0].mxu0 %v867
        %v906 = vpop.f32.mrb[0].mxu0
        %v907 = vadd.f32 %v703, %v906
        %v908 = vpop.f32.mrb[0].mxu0
        %v909 = vpop.f32.mrb[0].mxu0
        %v910 = vpop.f32.mrb[0].mxu0
        %911 = vdwg.mxu0
        %v912 = vsel %vm705, %v907, -inf
        %913 = vmax.xlane.f32.xlu0 %v912
        %v914 = vpop.xlane.xlu0 %913
        %v915 = vsub.f32 %v907, %v914
        %v916 = vmul.f32 %v915, 1.442695
        %v917 = vpow.pop %v916
        %v918 = vsel %vm705, %v917, 0.0
        %919 = vadd.xlane.f32.xlu0 %v918
        %v920 = vpop.xlane.xlu0 %919
        %v921 = vpack.c.bf16 %v917, %v917
        %923 = vrot.lane.b32.xlu0 %v697, 120
        %v924 = vpop.permute.xlu0 %923
        %v926 = vsel %vm705, %v921, 0
        %v929 = vsel %vm765, %v924, 0
        %931 = vmatprep.subr.bf16.mxu0 0
        %932 = vmatpush1.bf16.msra.mxu0 %v929
        %933 = vmatprep.subr.bf16.mxu0 0
        %934 = vmatpush1.bf16.msra.mxu0 0
        %935 = vmatprep.subr.bf16.mxu0 0
        %936 = vmatpush1.bf16.msra.mxu0 0
        %937 = vmatprep.subr.bf16.mxu0 0
        %938 = vmatpush1.bf16.msra.mxu0 0
        %939 = vmatprep.subr.bf16.mxu0 0
        %940 = vmatpush1.bf16.msra.mxu0 0
        %941 = vmatprep.subr.bf16.mxu0 0
        %942 = vmatpush1.bf16.msra.mxu0 0
        %943 = vmatprep.subr.bf16.mxu0 0
        %944 = vmatpush1.bf16.msra.mxu0 0
        %945 = vmatprep.subr.bf16.mxu0 0
        %946 = vmatpush1.bf16.msra.mxu0 0
        %947 = vmatprep.subr.bf16.mxu0 0
        %948 = vmatpush1.bf16.msra.mxu0 0
        %949 = vmatprep.subr.bf16.mxu0 0
        %950 = vmatpush1.bf16.msra.mxu0 0
        %951 = vmatprep.subr.bf16.mxu0 0
        %952 = vmatpush1.bf16.msra.mxu0 0
        %953 = vmatprep.subr.bf16.mxu0 0
        %954 = vmatpush1.bf16.msra.mxu0 0
        %955 = vmatprep.subr.bf16.mxu0 0
        %956 = vmatpush1.bf16.msra.mxu0 0
        %957 = vmatprep.subr.bf16.mxu0 0
        %958 = vmatpush1.bf16.msra.mxu0 0
        %959 = vmatprep.subr.bf16.mxu0 0
        %960 = vmatpush1.bf16.msra.mxu0 0
        %961 = vmatprep.subr.bf16.mxu0 0
        %962 = vmatpush1.bf16.msra.mxu0 0
        %963 = vmatprep.mubr.bf16.mxu0 0
        %964 = vmatmul.mubr.bf16.gmra.mrb[0].mxu0 %v926
        %v965 = vpop.f32.mrb[0].mxu0
        %v966 = vadd.f32 0.0, %v965
        %v967 = vpop.f32.mrb[0].mxu0
        %v968 = vpop.f32.mrb[0].mxu0
        %v969 = vpop.f32.mrb[0].mxu0
        %970 = vdwg.mxu0
        %v971 = vrcp.pop %v920
        %v972 = vmul.f32 %v966, %v971
        %v973 = vpack.c.bf16 %v972, %v972
        %v974 = vld [vmem:[#allocation14 + $0x4] sm:$0xf]
        %v976 = vsel %vm705, %v973, 0
        %v979 = vsel %vm765, %v974, 0
        %981 = vmatprep.subr.bf16.mxu0 0
        %982 = vmatpush1.bf16.msra.mxu0 %v979
        %983 = vmatprep.subr.bf16.mxu0 0
        %984 = vmatpush1.bf16.msra.mxu0 0
        %985 = vmatprep.subr.bf16.mxu0 0
        %986 = vmatpush1.bf16.msra.mxu0 0
        %987 = vmatprep.subr.bf16.mxu0 0
        %988 = vmatpush1.bf16.msra.mxu0 0
        %989 = vmatprep.subr.bf16.mxu0 0
        %990 = vmatpush1.bf16.msra.mxu0 0
        %991 = vmatprep.subr.bf16.mxu0 0
        %992 = vmatpush1.bf16.msra.mxu0 0
        %993 = vmatprep.subr.bf16.mxu0 0
        %994 = vmatpush1.bf16.msra.mxu0 0
        %995 = vmatprep.subr.bf16.mxu0 0
        %996 = vmatpush1.bf16.msra.mxu0 0
        %997 = vmatprep.subr.bf16.mxu0 0
        %998 = vmatpush1.bf16.msra.mxu0 0
        %999 = vmatprep.subr.bf16.mxu0 0
        %1000 = vmatpush1.bf16.msra.mxu0 0
        %1001 = vmatprep.subr.bf16.mxu0 0
        %1002 = vmatpush1.bf16.msra.mxu0 0
        %1003 = vmatprep.subr.bf16.mxu0 0
        %1004 = vmatpush1.bf16.msra.mxu0 0
        %1005 = vmatprep.subr.bf16.mxu0 0
        %1006 = vmatpush1.bf16.msra.mxu0 0
        %1007 = vmatprep.subr.bf16.mxu0 0
        %1008 = vmatpush1.bf16.msra.mxu0 0
        %1009 = vmatprep.subr.bf16.mxu0 0
        %1010 = vmatpush1.bf16.msra.mxu0 0
        %1011 = vmatprep.subr.bf16.mxu0 0
        %1012 = vmatpush1.bf16.msra.mxu0 0
        %1013 = vmatprep.mubr.bf16.mxu0 0
        %1014 = vmatmul.mubr.bf16.gmra.mrb[0].mxu0 %v976
        %v1015 = vpop.f32.mrb[0].mxu0
        %v1016 = vadd.f32 0.0, %v1015
        %v1017 = vpop.f32.mrb[0].mxu0
        %v1018 = vpop.f32.mrb[0].mxu0
        %v1019 = vpop.f32.mrb[0].mxu0
        %1020 = vdwg.mxu0
        %v1021 = vld [vmem:[#allocation2] sm:$0xff]
        %v1022 = vadd.f32 %v1021, %v1016
        %1023 = vst.msk [vmem:[#allocation2] sm:$0xff] %vm531, %v1022
        %1024 = vrot.lane.b32.xlu0 %v575, 112
        %v1025 = vpop.permute.xlu0 %1024
        %1026 = vrot.lane.b32.xlu0 %v636, 112
        %v1027 = vpop.permute.xlu0 %1026
        %v1029 = vsel %vm705, %v1025, 0
        %v1032 = vsel %vm705, %v1027, 0
        %1034 = vmatprep.subr.bf16.mxu0 0
        %1035 = vmatpush1.bf16.xpose.msra.mxu0 %v1032
        %1036 = vmatprep.subr.bf16.mxu0 0
        %1037 = vmatpush1.bf16.xpose.msra.mxu0 0
        %1038 = vmatprep.subr.bf16.mxu0 0
        %1039 = vmatpush1.bf16.xpose.msra.mxu0 0
        %1040 = vmatprep.subr.bf16.mxu0 0
        %1041 = vmatpush1.bf16.xpose.msra.mxu0 0
        %1042 = vmatprep.subr.bf16.mxu0 0
        %1043 = vmatpush1.bf16.xpose.msra.mxu0 0
        %1044 = vmatprep.subr.bf16.mxu0 0
        %1045 = vmatpush1.bf16.xpose.msra.mxu0 0
        %1046 = vmatprep.subr.bf16.mxu0 0
        %1047 = vmatpush1.bf16.xpose.msra.mxu0 0
        %1048 = vmatprep.subr.bf16.mxu0 0
        %1049 = vmatpush1.bf16.xpose.msra.mxu0 0
        %1050 = vmatprep.subr.bf16.mxu0 0
        %1051 = vmatpush1.bf16.xpose.msra.mxu0 0
        %1052 = vmatprep.subr.bf16.mxu0 0
        %1053 = vmatpush1.bf16.xpose.msra.mxu0 0
        %1054 = vmatprep.subr.bf16.mxu0 0
        %1055 = vmatpush1.bf16.xpose.msra.mxu0 0
        %1056 = vmatprep.subr.bf16.mxu0 0
        %1057 = vmatpush1.bf16.xpose.msra.mxu0 0
        %1058 = vmatprep.subr.bf16.mxu0 0
        %1059 = vmatpush1.bf16.xpose.msra.mxu0 0
        %1060 = vmatprep.subr.bf16.mxu0 0
        %1061 = vmatpush1.bf16.xpose.msra.mxu0 0
        %1062 = vmatprep.subr.bf16.mxu0 0
        %1063 = vmatpush1.bf16.xpose.msra.mxu0 0
        %1064 = vmatprep.subr.bf16.mxu0 0
        %1065 = vmatpush1.bf16.xpose.msra.mxu0 0
        %1066 = vmatprep.mubr.bf16.mxu0 0
        %1067 = vmatmul.mubr.bf16.gmra.mrb[0].mxu0 %v1029
        %v1068 = vpop.f32.mrb[0].mxu0
        %v1069 = vadd.f32 %v703, %v1068
        %v1070 = vpop.f32.mrb[0].mxu0
        %v1071 = vpop.f32.mrb[0].mxu0
        %v1072 = vpop.f32.mrb[0].mxu0
        %1073 = vdwg.mxu0
        %v1074 = vsel %vm705, %v1069, -inf
        %1075 = vmax.xlane.f32.xlu0 %v1074
        %v1076 = vpop.xlane.xlu0 %1075
        %v1077 = vsub.f32 %v1069, %v1076
        %v1078 = vmul.f32 %v1077, 1.442695
        %v1079 = vpow.pop %v1078
        %v1080 = vsel %vm705, %v1079, 0.0
        %1081 = vadd.xlane.f32.xlu0 %v1080
        %v1082 = vpop.xlane.xlu0 %1081
        %v1083 = vpack.c.bf16 %v1079, %v1079
        %1084 = vrot.lane.b32.xlu0 %v697, 112
        %v1085 = vpop.permute.xlu0 %1084
        %v1087 = vsel %vm705, %v1083, 0
        %v1090 = vsel %vm765, %v1085, 0
        %1092 = vmatprep.subr.bf16.mxu0 0
        %1093 = vmatpush1.bf16.msra.mxu0 %v1090
        %1094 = vmatprep.subr.bf16.mxu0 0
        %1095 = vmatpush1.bf16.msra.mxu0 0
        %1096 = vmatprep.subr.bf16.mxu0 0
        %1097 = vmatpush1.bf16.msra.mxu0 0
        %1098 = vmatprep.subr.bf16.mxu0 0
        %1099 = vmatpush1.bf16.msra.mxu0 0
        %1100 = vmatprep.subr.bf16.mxu0 0
        %1101 = vmatpush1.bf16.msra.mxu0 0
        %1102 = vmatprep.subr.bf16.mxu0 0
        %1103 = vmatpush1.bf16.msra.mxu0 0
        %1104 = vmatprep.subr.bf16.mxu0 0
        %1105 = vmatpush1.bf16.msra.mxu0 0
        %1106 = vmatprep.subr.bf16.mxu0 0
        %1107 = vmatpush1.bf16.msra.mxu0 0
        %1108 = vmatprep.subr.bf16.mxu0 0
        %1109 = vmatpush1.bf16.msra.mxu0 0
        %1110 = vmatprep.subr.bf16.mxu0 0
        %1111 = vmatpush1.bf16.msra.mxu0 0
        %1112 = vmatprep.subr.bf16.mxu0 0
        %1113 = vmatpush1.bf16.msra.mxu0 0
        %1114 = vmatprep.subr.bf16.mxu0 0
        %1115 = vmatpush1.bf16.msra.mxu0 0
        %1116 = vmatprep.subr.bf16.mxu0 0
        %1117 = vmatpush1.bf16.msra.mxu0 0
        %1118 = vmatprep.subr.bf16.mxu0 0
        %1119 = vmatpush1.bf16.msra.mxu0 0
        %1120 = vmatprep.subr.bf16.mxu0 0
        %1121 = vmatpush1.bf16.msra.mxu0 0
        %1122 = vmatprep.subr.bf16.mxu0 0
        %1123 = vmatpush1.bf16.msra.mxu0 0
        %1124 = vmatprep.mubr.bf16.mxu0 0
        %1125 = vmatmul.mubr.bf16.gmra.mrb[0].mxu0 %v1087
        %v1126 = vpop.f32.mrb[0].mxu0
        %v1127 = vadd.f32 0.0, %v1126
        %v1128 = vpop.f32.mrb[0].mxu0
        %v1129 = vpop.f32.mrb[0].mxu0
        %v1130 = vpop.f32.mrb[0].mxu0
        %1131 = vdwg.mxu0
        %v1132 = vrcp.pop %v1082
        %v1133 = vmul.f32 %v1127, %v1132
        %v1134 = vpack.c.bf16 %v1133, %v1133
        %v1135 = vld [vmem:[#allocation14 + $0x8] sm:$0xf]
        %v1137 = vsel %vm705, %v1134, 0
        %v1140 = vsel %vm765, %v1135, 0
        %1142 = vmatprep.subr.bf16.mxu0 0
        %1143 = vmatpush1.bf16.msra.mxu0 %v1140
        %1144 = vmatprep.subr.bf16.mxu0 0
        %1145 = vmatpush1.bf16.msra.mxu0 0
        %1146 = vmatprep.subr.bf16.mxu0 0
        %1147 = vmatpush1.bf16.msra.mxu0 0
        %1148 = vmatprep.subr.bf16.mxu0 0
        %1149 = vmatpush1.bf16.msra.mxu0 0
        %1150 = vmatprep.subr.bf16.mxu0 0
        %1151 = vmatpush1.bf16.msra.mxu0 0
        %1152 = vmatprep.subr.bf16.mxu0 0
        %1153 = vmatpush1.bf16.msra.mxu0 0
        %1154 = vmatprep.subr.bf16.mxu0 0
        %1155 = vmatpush1.bf16.msra.mxu0 0
        %1156 = vmatprep.subr.bf16.mxu0 0
        %1157 = vmatpush1.bf16.msra.mxu0 0
        %1158 = vmatprep.subr.bf16.mxu0 0
        %1159 = vmatpush1.bf16.msra.mxu0 0
        %1160 = vmatprep.subr.bf16.mxu0 0
        %1161 = vmatpush1.bf16.msra.mxu0 0
        %1162 = vmatprep.subr.bf16.mxu0 0
        %1163 = vmatpush1.bf16.msra.mxu0 0
        %1164 = vmatprep.subr.bf16.mxu0 0
        %1165 = vmatpush1.bf16.msra.mxu0 0
        %1166 = vmatprep.subr.bf16.mxu0 0
        %1167 = vmatpush1.bf16.msra.mxu0 0
        %1168 = vmatprep.subr.bf16.mxu0 0
        %1169 = vmatpush1.bf16.msra.mxu0 0
        %1170 = vmatprep.subr.bf16.mxu0 0
        %1171 = vmatpush1.bf16.msra.mxu0 0
        %1172 = vmatprep.subr.bf16.mxu0 0
        %1173 = vmatpush1.bf16.msra.mxu0 0
        %1174 = vmatprep.mubr.bf16.mxu0 0
        %1175 = vmatmul.mubr.bf16.gmra.mrb[0].mxu0 %v1137
        %v1176 = vpop.f32.mrb[0].mxu0
        %v1177 = vadd.f32 0.0, %v1176
        %v1178 = vpop.f32.mrb[0].mxu0
        %v1179 = vpop.f32.mrb[0].mxu0
        %v1180 = vpop.f32.mrb[0].mxu0
        %1181 = vdwg.mxu0
        %v1182 = vld [vmem:[#allocation2] sm:$0xff]
        %v1183 = vadd.f32 %v1182, %v1177
        %1184 = vst.msk [vmem:[#allocation2] sm:$0xff] %vm531, %v1183
        %1185 = vrot.lane.b32.xlu0 %v575, 104
        %v1186 = vpop.permute.xlu0 %1185
        %1187 = vrot.lane.b32.xlu0 %v636, 104
        %v1188 = vpop.permute.xlu0 %1187
        %v1190 = vsel %vm705, %v1186, 0
        %v1193 = vsel %vm705, %v1188, 0
        %1195 = vmatprep.subr.bf16.mxu0 0
        %1196 = vmatpush1.bf16.xpose.msra.mxu0 %v1193
        %1197 = vmatprep.subr.bf16.mxu0 0
        %1198 = vmatpush1.bf16.xpose.msra.mxu0 0
        %1199 = vmatprep.subr.bf16.mxu0 0
        %1200 = vmatpush1.bf16.xpose.msra.mxu0 0
        %1201 = vmatprep.subr.bf16.mxu0 0
        %1202 = vmatpush1.bf16.xpose.msra.mxu0 0
        %1203 = vmatprep.subr.bf16.mxu0 0
        %1204 = vmatpush1.bf16.xpose.msra.mxu0 0
        %1205 = vmatprep.subr.bf16.mxu0 0
        %1206 = vmatpush1.bf16.xpose.msra.mxu0 0
        %1207 = vmatprep.subr.bf16.mxu0 0
        %1208 = vmatpush1.bf16.xpose.msra.mxu0 0
        %1209 = vmatprep.subr.bf16.mxu0 0
        %1210 = vmatpush1.bf16.xpose.msra.mxu0 0
        %1211 = vmatprep.subr.bf16.mxu0 0
        %1212 = vmatpush1.bf16.xpose.msra.mxu0 0
        %1213 = vmatprep.subr.bf16.mxu0 0
        %1214 = vmatpush1.bf16.xpose.msra.mxu0 0
        %1215 = vmatprep.subr.bf16.mxu0 0
        %1216 = vmatpush1.bf16.xpose.msra.mxu0 0
        %1217 = vmatprep.subr.bf16.mxu0 0
        %1218 = vmatpush1.bf16.xpose.msra.mxu0 0
        %1219 = vmatprep.subr.bf16.mxu0 0
        %1220 = vmatpush1.bf16.xpose.msra.mxu0 0
        %1221 = vmatprep.subr.bf16.mxu0 0
        %1222 = vmatpush1.bf16.xpose.msra.mxu0 0
        %1223 = vmatprep.subr.bf16.mxu0 0
        %1224 = vmatpush1.bf16.xpose.msra.mxu0 0
        %1225 = vmatprep.subr.bf16.mxu0 0
        %1226 = vmatpush1.bf16.xpose.msra.mxu0 0
        %1227 = vmatprep.mubr.bf16.mxu0 0
        %1228 = vmatmul.mubr.bf16.gmra.mrb[0].mxu0 %v1190
        %v1229 = vpop.f32.mrb[0].mxu0
        %v1230 = vadd.f32 %v703, %v1229
        %v1231 = vpop.f32.mrb[0].mxu0
        %v1232 = vpop.f32.mrb[0].mxu0
        %v1233 = vpop.f32.mrb[0].mxu0
        %1234 = vdwg.mxu0
        %v1235 = vsel %vm705, %v1230, -inf
        %1236 = vmax.xlane.f32.xlu0 %v1235
        %v1237 = vpop.xlane.xlu0 %1236
        %v1238 = vsub.f32 %v1230, %v1237
        %v1239 = vmul.f32 %v1238, 1.442695
        %v1240 = vpow.pop %v1239
        %v1241 = vsel %vm705, %v1240, 0.0
        %1242 = vadd.xlane.f32.xlu0 %v1241
        %v1243 = vpop.xlane.xlu0 %1242
        %v1244 = vpack.c.bf16 %v1240, %v1240
        %1245 = vrot.lane.b32.xlu0 %v697, 104
        %v1246 = vpop.permute.xlu0 %1245
        %v1248 = vsel %vm705, %v1244, 0
        %v1251 = vsel %vm765, %v1246, 0
        %1253 = vmatprep.subr.bf16.mxu0 0
        %1254 = vmatpush1.bf16.msra.mxu0 %v1251
        %1255 = vmatprep.subr.bf16.mxu0 0
        %1256 = vmatpush1.bf16.msra.mxu0 0
        %1257 = vmatprep.subr.bf16.mxu0 0
        %1258 = vmatpush1.bf16.msra.mxu0 0
        %1259 = vmatprep.subr.bf16.mxu0 0
        %1260 = vmatpush1.bf16.msra.mxu0 0
        %1261 = vmatprep.subr.bf16.mxu0 0
        %1262 = vmatpush1.bf16.msra.mxu0 0
        %1263 = vmatprep.subr.bf16.mxu0 0
        %1264 = vmatpush1.bf16.msra.mxu0 0
        %1265 = vmatprep.subr.bf16.mxu0 0
        %1266 = vmatpush1.bf16.msra.mxu0 0
        %1267 = vmatprep.subr.bf16.mxu0 0
        %1268 = vmatpush1.bf16.msra.mxu0 0
        %1269 = vmatprep.subr.bf16.mxu0 0
        %1270 = vmatpush1.bf16.msra.mxu0 0
        %1271 = vmatprep.subr.bf16.mxu0 0
        %1272 = vmatpush1.bf16.msra.mxu0 0
        %1273 = vmatprep.subr.bf16.mxu0 0
        %1274 = vmatpush1.bf16.msra.mxu0 0
        %1275 = vmatprep.subr.bf16.mxu0 0
        %1276 = vmatpush1.bf16.msra.mxu0 0
        %1277 = vmatprep.subr.bf16.mxu0 0
        %1278 = vmatpush1.bf16.msra.mxu0 0
        %1279 = vmatprep.subr.bf16.mxu0 0
        %1280 = vmatpush1.bf16.msra.mxu0 0
        %1281 = vmatprep.subr.bf16.mxu0 0
        %1282 = vmatpush1.bf16.msra.mxu0 0
        %1283 = vmatprep.subr.bf16.mxu0 0
        %1284 = vmatpush1.bf16.msra.mxu0 0
        %1285 = vmatprep.mubr.bf16.mxu0 0
        %1286 = vmatmul.mubr.bf16.gmra.mrb[0].mxu0 %v1248
        %v1287 = vpop.f32.mrb[0].mxu0
        %v1288 = vadd.f32 0.0, %v1287
        %v1289 = vpop.f32.mrb[0].mxu0
        %v1290 = vpop.f32.mrb[0].mxu0
        %v1291 = vpop.f32.mrb[0].mxu0
        %1292 = vdwg.mxu0
        %v1293 = vrcp.pop %v1243
        %v1294 = vmul.f32 %v1288, %v1293
        %v1295 = vpack.c.bf16 %v1294, %v1294
        %v1296 = vld [vmem:[#allocation14 + $0xc] sm:$0xf]
        %v1298 = vsel %vm705, %v1295, 0
        %v1301 = vsel %vm765, %v1296, 0
        %1303 = vmatprep.subr.bf16.mxu0 0
        %1304 = vmatpush1.bf16.msra.mxu0 %v1301
        %1305 = vmatprep.subr.bf16.mxu0 0
        %1306 = vmatpush1.bf16.msra.mxu0 0
        %1307 = vmatprep.subr.bf16.mxu0 0
        %1308 = vmatpush1.bf16.msra.mxu0 0
        %1309 = vmatprep.subr.bf16.mxu0 0
        %1310 = vmatpush1.bf16.msra.mxu0 0
        %1311 = vmatprep.subr.bf16.mxu0 0
        %1312 = vmatpush1.bf16.msra.mxu0 0
        %1313 = vmatprep.subr.bf16.mxu0 0
        %1314 = vmatpush1.bf16.msra.mxu0 0
        %1315 = vmatprep.subr.bf16.mxu0 0
        %1316 = vmatpush1.bf16.msra.mxu0 0
        %1317 = vmatprep.subr.bf16.mxu0 0
        %1318 = vmatpush1.bf16.msra.mxu0 0
        %1319 = vmatprep.subr.bf16.mxu0 0
        %1320 = vmatpush1.bf16.msra.mxu0 0
        %1321 = vmatprep.subr.bf16.mxu0 0
        %1322 = vmatpush1.bf16.msra.mxu0 0
        %1323 = vmatprep.subr.bf16.mxu0 0
        %1324 = vmatpush1.bf16.msra.mxu0 0
        %1325 = vmatprep.subr.bf16.mxu0 0
        %1326 = vmatpush1.bf16.msra.mxu0 0
        %1327 = vmatprep.subr.bf16.mxu0 0
        %1328 = vmatpush1.bf16.msra.mxu0 0
        %1329 = vmatprep.subr.bf16.mxu0 0
        %1330 = vmatpush1.bf16.msra.mxu0 0
        %1331 = vmatprep.subr.bf16.mxu0 0
        %1332 = vmatpush1.bf16.msra.mxu0 0
        %1333 = vmatprep.subr.bf16.mxu0 0
        %1334 = vmatpush1.bf16.msra.mxu0 0
        %1335 = vmatprep.mubr.bf16.mxu0 0
        %1336 = vmatmul.mubr.bf16.gmra.mrb[0].mxu0 %v1298
        %v1337 = vpop.f32.mrb[0].mxu0
        %v1338 = vadd.f32 0.0, %v1337
        %v1339 = vpop.f32.mrb[0].mxu0
        %v1340 = vpop.f32.mrb[0].mxu0
        %v1341 = vpop.f32.mrb[0].mxu0
        %1342 = vdwg.mxu0
        %v1343 = vld [vmem:[#allocation2] sm:$0xff]
        %v1344 = vadd.f32 %v1343, %v1338
        %1345 = vst.msk [vmem:[#allocation2] sm:$0xff] %vm531, %v1344
        %v1346 = vld [vmem:[#allocation2] sm:$0xff]
        %v1347 = vld [vmem:[%s8] sm:$0x1]
        %v1349 = vlaneseq
        %v1350 = vshrl.u32 %v1349, 7
        %v1351 = vsub.s32 0, %v1350
        %v1352 = vrot.slane %v1347, %v1351
        %v1354 = vadd.f32 %v1346, %v1352
        %1355 = vst.msk [vmem:[%s512] sm:$0xff] %vm531, %v1354
        %s1356 = sand.u32 %s266, 1
        %s1357 = scalar_lea.sflag [#allocation5], %s1356
        %s1358 = sand.u32 %s266, 1
        %s1359 = smul.addr %s1358, 8
        %s1360 = scalar_lea.vmem [#allocation15], %s1359
        // Predicated region
        $region85: #{tpu_custom_call.1} parent=55 // pred_check
          %p1361 = pneg %p276
        $region86: #{tpu_custom_call.1} parent=55 // pred_check_branch
          %1363 = sbr.rel (%p1361) target = $region88
        $region87: #{tpu_custom_call.1} parent=55 // pred_region
          %s1365 = ssub.s32 128, 128
          %1366 = vsyncadd %s1357, %s1365
          %s1367 = sadd.s32 %s38, %s37
          %s1368 = smul.addr %s1367, 128
          %s1369 = scalar_lea.hbm %s9, %s1368
          %s1371 = sshll.u32 %s1360, 4
          %s1372 = int_to_ptr.vmem [resolvable:$true] %s1371
          %1374 = dma.vmem_to_hbm [thread:$0]  %s1372, 128, %s1369, %s1357
        $region88: #{tpu_custom_call.1} parent=55 // pred_fallthru
          _
      $region56: #{tpu_custom_call.1} parent=5 // pred_fallthru
        _
      %p1375 = scmp.le.s32.totalorder 2, %s28
      // Predicated region
      $region89: #{tpu_custom_call.1} parent=5 // pred_check
        %p1376 = pneg %p1375
      $region90: #{tpu_custom_call.1} parent=5 // pred_check_branch
        %1378 = sbr.rel (%p1376) target = $region92
      $region91: #{tpu_custom_call.1} parent=5 // pred_region
        %s1379 = ssub.s32 %s28, 2
        // Predicated region
        $region93: #{tpu_custom_call.1} parent=91 // pred_check
          %p1380 = pneg %p282
        $region94: #{tpu_custom_call.1} parent=91 // pred_check_branch
          %1382 = sbr.rel (%p1380) target = $region96
        $region95: #{tpu_custom_call.1} parent=91 // pred_region
          %s1383 = sand.u32 %s267, 1
          %s1384 = scalar_lea.sflag [#allocation5], %s1383
          %s1385 = sand.u32 %s267, 1
          %s1386 = smul.addr %s1385, 8
          %s1387 = scalar_lea.vmem [#allocation15], %s1386
          %1388 = dma.done %s1384, 128
        $region96: #{tpu_custom_call.1} parent=91 // pred_fallthru
          _
      $region92: #{tpu_custom_call.1} parent=5 // pred_fallthru
        _
    $region6: #{tpu_custom_call.1} parent=1 // loop_footer
      %s32 = sadd.s32 1, %s28
    $region7: #{tpu_custom_call.1} parent=1 // loop_footer_branch
      %27 = sbr.rel target = $region3
    $region8: #{tpu_custom_call.1} parent=1 // loop_exit
      _
    %1389 = vsyncpa [#allocation4], 1
    %s1390 = scalar_lea.sflag [#allocation4], 1
    %1391 = vsyncpa %s1390, 1
    %1392 = vsyncpa [#allocation7], 1
    %s1393 = scalar_lea.sflag [#allocation7], 1
    %1394 = vsyncpa %s1393, 1
    %1395 = vsyncpa [#allocation10], 1
    %s1396 = scalar_lea.sflag [#allocation10], 1
    %1397 = vsyncpa %s1396, 1
    %1398 = vsyncpa [#allocation13], 1
    %1399 = vsyncpa [#allocation5], 1
    %s1400 = scalar_lea.sflag [#allocation5], 1
    %1401 = vsyncpa %s1400, 1

</llo_original>
